<compile_context>
chip_gen: v7x
topology: tpu7x:2x2x1
jax: 0.10.0
libtpu: 0.0.40
codegen_flags: <defaults>
</compile_context>

<pallas_src>
import math
from functools import partial

import jax
import jax.numpy as jnp
from jax.experimental import pallas as pl
from jax.experimental.pallas import tpu as pltpu


def _erf(x):
    # lax.erf lowering is not guaranteed in Mosaic; use an f32-accurate polynomial
    # erf (Abramowitz & Stegun 7.1.26, max abs err ~1.5e-7) built only from ops
    # that always lower (exp, mul, add, where, div).
    a1, a2, a3, a4, a5 = 0.254829592, -0.284496736, 1.421413741, -1.453152027, 1.061405429
    p = 0.3275911
    sgn = jnp.where(x >= 0.0, 1.0, -1.0)
    z = jnp.abs(x)
    t = 1.0 / (1.0 + p * z)                 # exact reciprocal (parity with torch)
    poly = ((((a5 * t + a4) * t + a3) * t + a2) * t + a1) * t
    return sgn * (1.0 - poly * jnp.exp(-z * z))


def _layernorm(x, gamma, beta, eps):
    mu = jnp.mean(x, axis=-1, keepdims=True)
    var = jnp.mean((x - mu) ** 2, axis=-1, keepdims=True)
    return (x - mu) * jax.lax.rsqrt(var + eps) * gamma + beta


def _attention_block_kernel(
    x_ref,                       # (1, S, D) f32   activations for this batch element
    wproj_ref, bproj_ref,        # (D, 3D) bf16 / (1, 3D) f32   fused qkv∘in_proj
    wout_ref, bout_ref,          # (D, D) bf16 / (1, D) f32     MHA out_proj
    g1_ref, b1_ref,              # norm1
    g2_ref, b2_ref,              # norm2
    gf_ref, bf_ref,              # FeedForward.norm
    w1_ref, bb1_ref,             # linear1: (D, F) bf16 / (1, F) f32
    w2_ref, bb2_ref,             # linear2: (F, D) bf16 / (1, D) f32
    o_ref,                       # (1, S, D) f32
    *, num_heads, head_dim, ln_eps, ff_ln_eps,
):
    x = x_ref[0]                                          # (S, D) f32 (residual input)
    S, D = x.shape
    H, HD = num_heads, head_dim

    # ---- pre-norm + ONE full-width fused (qkv -> MHA in_proj) projection ---------
    xn = _layernorm(x, g1_ref[...], b1_ref[...], ln_eps).astype(jnp.bfloat16)
    qkv = jnp.dot(xn, wproj_ref[...],
                  preferred_element_type=jnp.float32) + bproj_ref[...]   # (S, 3D) f32
    q = qkv[:, :D].astype(jnp.bfloat16)        # 1/sqrt(HD) already folded into weight
    k = qkv[:, D:2 * D].astype(jnp.bfloat16)
    v = qkv[:, 2 * D:].astype(jnp.bfloat16)

    # ---- causal additive mask, built once per batch element from thin iotas ------
    row = jax.lax.broadcasted_iota(jnp.int32, (S, 1), 0)
    col = jax.lax.broadcasted_iota(jnp.int32, (1, S), 1)
    neg = jnp.where(col > row, -1e30, 0.0).astype(jnp.float32)           # (S, S) f32

    # ---- per-head attention (static loop over register-resident slices) ----------
    heads = []
    for h in range(H):
        sl = slice(h * HD, (h + 1) * HD)
        qh, kh, vh = q[:, sl], k[:, sl], v[:, sl]
        # q @ k^T without an explicit transpose: contract dim 1 of both operands.
        s = jax.lax.dot_general(qh, kh, (((1,), (1,)), ((), ())),
                                preferred_element_type=jnp.float32)      # (S, S) f32
        s = s + neg                                   # mask applied while s is f32
        s = s - jnp.max(s, axis=-1, keepdims=True)
        p = jnp.exp(s)
        p = p * pl.reciprocal(jnp.sum(p, axis=-1, keepdims=True), approx=False)
        heads.append(jnp.dot(p.astype(jnp.bfloat16), vh,
                             preferred_element_type=jnp.float32))        # (S, HD)
    attn = heads[0] if H == 1 else jnp.concatenate(heads, axis=-1)       # (S, D) f32

    # ---- full-width out-projection + residual -------------------------------------
    x1 = jnp.dot(attn.astype(jnp.bfloat16), wout_ref[...],
                 preferred_element_type=jnp.float32) + bout_ref[...] + x  # (S, D)

    # ---- norm2 -> FeedForward(norm -> linear1 -> GELU -> linear2) -> residual -----
    xn2 = _layernorm(x1, g2_ref[...], b2_ref[...], ln_eps)
    ff_in = _layernorm(xn2, gf_ref[...], bf_ref[...], ff_ln_eps).astype(jnp.bfloat16)
    h1 = jnp.dot(ff_in, w1_ref[...],
                 preferred_element_type=jnp.float32) + bb1_ref[...]       # (S, F)
    h1 = 0.5 * h1 * (1.0 + _erf(h1 * (1.0 / math.sqrt(2.0))))             # exact-erf GELU
    h2 = jnp.dot(h1.astype(jnp.bfloat16), w2_ref[...],
                 preferred_element_type=jnp.float32) + bb2_ref[...]       # (S, D)
    o_ref[0] = (h2 + x1).astype(o_ref.dtype)


def _vmem_limit_bytes():
    # ~75% of physical VMEM: ~96 MiB on v5e/v6e (128 MiB), ~48 MiB on v7x (64 MiB).
    cap = 64 * 1024 * 1024  # conservative fallback (safe on every generation)
    try:
        info = pltpu.get_tpu_info()
        c = getattr(info, "vmem_capacity_bytes", None)
        if c:
            cap = int(c)
    except Exception:
        pass
    return max(32 * 1024 * 1024, min(int(cap) * 3 // 4, 100 * 1024 * 1024))


def pack_params(params, num_heads):
    """One-time packing of PyTorch-layout parameters into kernel operands.

    Folds the qkv Linear and the MHA in_proj into a single (D, 3D) projection,
    folds the 1/sqrt(head_dim) query scale into its q columns, and casts the
    matmul weights to bf16.  Call once and cache (per perf review)."""
    D = params["g1"].shape[-1]
    HD = D // num_heads
    wqkv, bqkv = params["wqkv"], params["bqkv"]          # (D, 3D), (1, 3D)  (== W.T)
    win, b_in = params["win"], params["bin"]             # (D, 3D), (1, 3D)  (== W.T)

    def fuse(i):
        sl = slice(i * D, (i + 1) * D)
        w = wqkv[:, sl] @ win[:, sl]                     # (D, D)
        b = bqkv[:, sl] @ win[:, sl] + b_in[:, sl]       # (1, D)
        return w, b

    wq, bq = fuse(0)
    wk, bk = fuse(1)
    wv, bv = fuse(2)
    scale = 1.0 / math.sqrt(HD)
    wq, bq = wq * scale, bq * scale                      # fold attention scale into q

    return dict(
        w_fused=jnp.concatenate([wq, wk, wv], axis=-1).astype(jnp.bfloat16),   # (D, 3D)
        b_fused=jnp.concatenate([bq, bk, bv], axis=-1).astype(jnp.float32),    # (1, 3D)
        wout=params["wout"].astype(jnp.bfloat16), bout=params["bout"],
        g1=params["g1"], b1=params["b1"],
        g2=params["g2"], b2=params["b2"],
        gf=params["gf"], bf=params["bf"],
        w1=params["w1"].astype(jnp.bfloat16), bb1=params["bb1"],
        w2=params["w2"].astype(jnp.bfloat16), bb2=params["bb2"],
    )


def attention_block(x_sbd, packed, *, num_heads, ln_eps, ff_ln_eps=1e-5):
    S, B, D = x_sbd.shape
    HD = D // num_heads

    # (S, B, D) -> (B, S, D).
    # TODO(synk): accept (B, S, D) at the boundary (or relayout in bf16) to drop
    #             this HBM round trip -- matters most on v5e's ~820 GB/s HBM.
    x = jnp.transpose(x_sbd, (1, 0, 2)).astype(jnp.float32)

    const_ins = [
        packed["w_fused"], packed["b_fused"],
        packed["wout"], packed["bout"],
        packed["g1"], packed["b1"],
        packed["g2"], packed["b2"],
        packed["gf"], packed["bf"],
        packed["w1"], packed["bb1"],
        packed["w2"], packed["bb2"],
    ]

    def const_spec(a):   # full block, same for every grid step (stays VMEM-resident)
        return pl.BlockSpec(a.shape, lambda b, _n=a.ndim: (0,) * _n)

    kernel = partial(_attention_block_kernel, num_heads=num_heads, head_dim=HD,
                     ln_eps=ln_eps, ff_ln_eps=ff_ln_eps)

    out = pl.pallas_call(
        kernel,
        out_shape=jax.ShapeDtypeStruct((B, S, D), jnp.float32),
        grid=(B,),                                       # one grid step per batch element
        in_specs=[pl.BlockSpec((1, S, D), lambda b: (b, 0, 0))]
                 + [const_spec(a) for a in const_ins],
        out_specs=pl.BlockSpec((1, S, D), lambda b: (b, 0, 0)),
        compiler_params=pltpu.CompilerParams(
            dimension_semantics=("parallel",),
            vmem_limit_bytes=_vmem_limit_bytes(),
        ),
    )(x, *const_ins)

    return jnp.transpose(out, (1, 0, 2))                 # back to (S, B, D)


def init_params(key, d_model, ff_dim):
    ks = jax.random.split(key, 8)
    w = lambda k, shape: jax.random.normal(k, shape, jnp.float32) * 0.05
    return dict(
        g1=jnp.ones((1, d_model), jnp.float32),
        b1=jnp.zeros((1, d_model), jnp.float32),
        wqkv=w(ks[0], (d_model, 3 * d_model)),     # == qkv.weight.T
        bqkv=w(ks[1], (1, 3 * d_model)),
        win=w(ks[2], (d_model, 3 * d_model)),      # == attention.in_proj_weight.T
        bin=w(ks[3], (1, 3 * d_model)),
        wout=w(ks[4], (d_model, d_model)),         # == attention.out_proj.weight.T
        bout=w(ks[5], (1, d_model)),
        g2=jnp.ones((1, d_model), jnp.float32),
        b2=jnp.zeros((1, d_model), jnp.float32),
        gf=jnp.ones((1, d_model), jnp.float32),
        bf=jnp.zeros((1, d_model), jnp.float32),
        w1=w(ks[6], (d_model, ff_dim)),            # == feed_forward.linear1.weight.T
        bb1=jnp.zeros((1, ff_dim), jnp.float32),
        w2=w(ks[7], (ff_dim, d_model)),            # == feed_forward.linear2.weight.T
        bb2=jnp.zeros((1, d_model), jnp.float32),
    )


if __name__ == "__main__":
    d_model, num_heads, ff_dim, max_len = 32, 4, 64, 16
    seq, batch = 8, 2
    layer_norm_eps = 1e-5

    key = jax.random.PRNGKey(0)
    kx, kp = jax.random.split(key)
    # PyTorch convention (batch_first=False): x is (seq, batch, d_model)
    x = jax.random.normal(kx, (seq, batch, d_model), jnp.float32)
    params = init_params(kp, d_model, ff_dim)
    packed = pack_params(params, num_heads)   # one-time weight packing (cacheable)

    out = attention_block(x, packed, num_heads=num_heads, ln_eps=layer_norm_eps)
    out = jax.block_until_ready(out)
    assert out.shape == (seq, batch, d_model)
    assert bool(jnp.all(jnp.isfinite(out)))
    print("KERNEL_OK")
</pallas_src>

<mosaic_0001>
module attributes {stable_mosaic.version = 11 : i64} {
  func.func @_attention_block_kernel(%arg0: i32, %arg1: memref<1x8x32xf32, #tpu.memory_space<vmem>>, %arg2: memref<32x96xbf16, #tpu.memory_space<vmem>>, %arg3: memref<1x96xf32, #tpu.memory_space<vmem>>, %arg4: memref<32x32xbf16, #tpu.memory_space<vmem>>, %arg5: memref<1x32xf32, #tpu.memory_space<vmem>>, %arg6: memref<1x32xf32, #tpu.memory_space<vmem>>, %arg7: memref<1x32xf32, #tpu.memory_space<vmem>>, %arg8: memref<1x32xf32, #tpu.memory_space<vmem>>, %arg9: memref<1x32xf32, #tpu.memory_space<vmem>>, %arg10: memref<1x32xf32, #tpu.memory_space<vmem>>, %arg11: memref<1x32xf32, #tpu.memory_space<vmem>>, %arg12: memref<32x64xbf16, #tpu.memory_space<vmem>>, %arg13: memref<1x64xf32, #tpu.memory_space<vmem>>, %arg14: memref<64x32xbf16, #tpu.memory_space<vmem>>, %arg15: memref<1x32xf32, #tpu.memory_space<vmem>>, %arg16: memref<1x8x32xf32, #tpu.memory_space<vmem>>) attributes {dimension_semantics = [#tpu.dimension_semantics<parallel>], iteration_bounds = array<i64: 2>, scalar_prefetch = 0 : i64, scratch_operands = 0 : i64, tpu.core_type = #tpu.core_type<tc>, window_params = [{transform_indices = @transform_0, window_bounds = array<i64: 1, 8, 32>}, {pipeline_mode = #tpu.pipeline_mode<synchronous>, transform_indices = @transform_1, window_bounds = array<i64: 32, 96>}, {pipeline_mode = #tpu.pipeline_mode<synchronous>, transform_indices = @transform_2, window_bounds = array<i64: 1, 96>}, {pipeline_mode = #tpu.pipeline_mode<synchronous>, transform_indices = @transform_3, window_bounds = array<i64: 32, 32>}, {pipeline_mode = #tpu.pipeline_mode<synchronous>, transform_indices = @transform_4, window_bounds = array<i64: 1, 32>}, {pipeline_mode = #tpu.pipeline_mode<synchronous>, transform_indices = @transform_5, window_bounds = array<i64: 1, 32>}, {pipeline_mode = #tpu.pipeline_mode<synchronous>, transform_indices = @transform_6, window_bounds = array<i64: 1, 32>}, {pipeline_mode = #tpu.pipeline_mode<synchronous>, transform_indices = @transform_7, window_bounds = array<i64: 1, 32>}, {pipeline_mode = #tpu.pipeline_mode<synchronous>, transform_indices = @transform_8, window_bounds = array<i64: 1, 32>}, {pipeline_mode = #tpu.pipeline_mode<synchronous>, transform_indices = @transform_9, window_bounds = array<i64: 1, 32>}, {pipeline_mode = #tpu.pipeline_mode<synchronous>, transform_indices = @transform_10, window_bounds = array<i64: 1, 32>}, {pipeline_mode = #tpu.pipeline_mode<synchronous>, transform_indices = @transform_11, window_bounds = array<i64: 32, 64>}, {pipeline_mode = #tpu.pipeline_mode<synchronous>, transform_indices = @transform_12, window_bounds = array<i64: 1, 64>}, {pipeline_mode = #tpu.pipeline_mode<synchronous>, transform_indices = @transform_13, window_bounds = array<i64: 64, 32>}, {pipeline_mode = #tpu.pipeline_mode<synchronous>, transform_indices = @transform_14, window_bounds = array<i64: 1, 32>}, {transform_indices = @transform_15, window_bounds = array<i64: 1, 8, 32>}]} {
    %c0 = arith.constant 0 : index
    %c0_0 = arith.constant 0 : index
    %c0_1 = arith.constant 0 : index
    %0 = vector.load %arg1[%c0, %c0_0, %c0_1] : memref<1x8x32xf32, #tpu.memory_space<vmem>>, vector<1x8x32xf32>
    %1 = vector.shape_cast %0 : vector<1x8x32xf32> to vector<8x32xf32>
    %c0_2 = arith.constant 0 : index
    %c0_3 = arith.constant 0 : index
    %2 = vector.load %arg6[%c0_2, %c0_3] : memref<1x32xf32, #tpu.memory_space<vmem>>, vector<1x32xf32>
    %c0_4 = arith.constant 0 : index
    %c0_5 = arith.constant 0 : index
    %3 = vector.load %arg7[%c0_4, %c0_5] : memref<1x32xf32, #tpu.memory_space<vmem>>, vector<1x32xf32>
    %cst = arith.constant dense<0.000000e+00> : vector<8xf32>
    %4 = vector.multi_reduction <add>, %1, %cst [1] : vector<8x32xf32> to vector<8xf32>
    %5 = vector.shape_cast %4 : vector<8xf32> to vector<8x1xf32>
    %cst_6 = arith.constant 3.200000e+01 : f32
    %6 = vector.broadcast %cst_6 : f32 to vector<8x1xf32>
    %7 = arith.divf %5, %6 : vector<8x1xf32>
    %8 = vector.broadcast %7 : vector<8x1xf32> to vector<8x32xf32>
    %9 = arith.subf %1, %8 : vector<8x32xf32>
    %10 = arith.mulf %9, %9 : vector<8x32xf32>
    %cst_7 = arith.constant dense<0.000000e+00> : vector<8xf32>
    %11 = vector.multi_reduction <add>, %10, %cst_7 [1] : vector<8x32xf32> to vector<8xf32>
    %12 = vector.shape_cast %11 : vector<8xf32> to vector<8x1xf32>
    %cst_8 = arith.constant 3.200000e+01 : f32
    %13 = vector.broadcast %cst_8 : f32 to vector<8x1xf32>
    %14 = arith.divf %12, %13 : vector<8x1xf32>
    %15 = vector.broadcast %7 : vector<8x1xf32> to vector<8x32xf32>
    %16 = arith.subf %1, %15 : vector<8x32xf32>
    %cst_9 = arith.constant 9.99999974E-6 : f32
    %17 = vector.broadcast %cst_9 : f32 to vector<8x1xf32>
    %18 = arith.addf %14, %17 : vector<8x1xf32>
    %19 = math.rsqrt %18 : vector<8x1xf32>
    %20 = vector.broadcast %19 : vector<8x1xf32> to vector<8x32xf32>
    %21 = arith.mulf %16, %20 : vector<8x32xf32>
    %22 = vector.broadcast %2 : vector<1x32xf32> to vector<8x32xf32>
    %23 = arith.mulf %21, %22 : vector<8x32xf32>
    %24 = vector.broadcast %3 : vector<1x32xf32> to vector<8x32xf32>
    %25 = arith.addf %23, %24 : vector<8x32xf32>
    %26 = arith.truncf %25 : vector<8x32xf32> to vector<8x32xbf16>
    %c0_10 = arith.constant 0 : index
    %c0_11 = arith.constant 0 : index
    %27 = vector.load %arg2[%c0_10, %c0_11] : memref<32x96xbf16, #tpu.memory_space<vmem>>, vector<32x96xbf16>
    %cst_12 = arith.constant dense<0.000000e+00> : vector<8x96xf32>
    %28 = tpu.matmul %26, %27, %cst_12 {dimension_numbers = #tpu.dot_dimension_numbers<[1], [0], [0], [1], [0, 0, 1, 1], [], []>} : vector<8x32xbf16>, vector<32x96xbf16>, vector<8x96xf32> -> vector<8x96xf32>
    %c0_13 = arith.constant 0 : index
    %c0_14 = arith.constant 0 : index
    %29 = vector.load %arg3[%c0_13, %c0_14] : memref<1x96xf32, #tpu.memory_space<vmem>>, vector<1x96xf32>
    %30 = vector.broadcast %29 : vector<1x96xf32> to vector<8x96xf32>
    %31 = arith.addf %28, %30 : vector<8x96xf32>
    %32 = vector.extract_strided_slice %31 {offsets = [0, 0], sizes = [8, 32], strides = [1, 1]} : vector<8x96xf32> to vector<8x32xf32>
    %33 = arith.truncf %32 : vector<8x32xf32> to vector<8x32xbf16>
    %34 = vector.extract_strided_slice %31 {offsets = [0, 32], sizes = [8, 32], strides = [1, 1]} : vector<8x96xf32> to vector<8x32xf32>
    %35 = arith.truncf %34 : vector<8x32xf32> to vector<8x32xbf16>
    %36 = vector.extract_strided_slice %31 {offsets = [0, 64], sizes = [8, 32], strides = [1, 1]} : vector<8x96xf32> to vector<8x32xf32>
    %37 = arith.truncf %36 : vector<8x32xf32> to vector<8x32xbf16>
    %38 = tpu.iota {dimensions = array<i32: 0>} : vector<8x1xi32>
    %39 = tpu.iota {dimensions = array<i32: 1>} : vector<1x8xi32>
    %40 = vector.broadcast %39 : vector<1x8xi32> to vector<8x8xi32>
    %41 = vector.broadcast %38 : vector<8x1xi32> to vector<8x8xi32>
    %42 = arith.cmpi sgt, %40, %41 : vector<8x8xi32>
    %cst_15 = arith.constant -1.000000e+30 : f32
    %cst_16 = arith.constant 0.000000e+00 : f32
    %43 = vector.broadcast %cst_15 : f32 to vector<8x8xf32>
    %44 = vector.broadcast %cst_16 : f32 to vector<8x8xf32>
    %45 = arith.select %42, %43, %44 : vector<8x8xi1>, vector<8x8xf32>
    %46 = vector.extract_strided_slice %33 {offsets = [0, 0], sizes = [8, 8], strides = [1, 1]} : vector<8x32xbf16> to vector<8x8xbf16>
    %47 = vector.extract_strided_slice %35 {offsets = [0, 0], sizes = [8, 8], strides = [1, 1]} : vector<8x32xbf16> to vector<8x8xbf16>
    %48 = vector.extract_strided_slice %37 {offsets = [0, 0], sizes = [8, 8], strides = [1, 1]} : vector<8x32xbf16> to vector<8x8xbf16>
    %cst_17 = arith.constant dense<0.000000e+00> : vector<8x8xf32>
    %49 = tpu.matmul %46, %47, %cst_17 {dimension_numbers = #tpu.dot_dimension_numbers<[1], [1], [0], [0], [0, 0, 1, 0], [], []>} : vector<8x8xbf16>, vector<8x8xbf16>, vector<8x8xf32> -> vector<8x8xf32>
    %50 = arith.addf %49, %45 : vector<8x8xf32>
    %cst_18 = arith.constant dense<0xFF800000> : vector<8xf32>
    %51 = vector.multi_reduction <maximumf>, %50, %cst_18 [1] : vector<8x8xf32> to vector<8xf32>
    %52 = vector.shape_cast %51 : vector<8xf32> to vector<8x1xf32>
    %53 = vector.broadcast %52 : vector<8x1xf32> to vector<8x8xf32>
    %54 = arith.subf %50, %53 : vector<8x8xf32>
    %55 = math.exp %54 : vector<8x8xf32>
    %cst_19 = arith.constant dense<0.000000e+00> : vector<8xf32>
    %56 = vector.multi_reduction <add>, %55, %cst_19 [1] : vector<8x8xf32> to vector<8xf32>
    %57 = vector.shape_cast %56 : vector<8xf32> to vector<8x1xf32>
    %58 = tpu.reciprocal %57 : vector<8x1xf32> -> vector<8x1xf32>
    %59 = vector.broadcast %58 : vector<8x1xf32> to vector<8x8xf32>
    %60 = arith.mulf %55, %59 : vector<8x8xf32>
    %61 = arith.truncf %60 : vector<8x8xf32> to vector<8x8xbf16>
    %cst_20 = arith.constant dense<0.000000e+00> : vector<8x8xf32>
    %62 = tpu.matmul %61, %48, %cst_20 {dimension_numbers = #tpu.dot_dimension_numbers<[1], [0], [0], [1], [0, 0, 1, 1], [], []>} : vector<8x8xbf16>, vector<8x8xbf16>, vector<8x8xf32> -> vector<8x8xf32>
    %63 = vector.extract_strided_slice %33 {offsets = [0, 8], sizes = [8, 8], strides = [1, 1]} : vector<8x32xbf16> to vector<8x8xbf16>
    %64 = vector.extract_strided_slice %35 {offsets = [0, 8], sizes = [8, 8], strides = [1, 1]} : vector<8x32xbf16> to vector<8x8xbf16>
    %65 = vector.extract_strided_slice %37 {offsets = [0, 8], sizes = [8, 8], strides = [1, 1]} : vector<8x32xbf16> to vector<8x8xbf16>
    %cst_21 = arith.constant dense<0.000000e+00> : vector<8x8xf32>
    %66 = tpu.matmul %63, %64, %cst_21 {dimension_numbers = #tpu.dot_dimension_numbers<[1], [1], [0], [0], [0, 0, 1, 0], [], []>} : vector<8x8xbf16>, vector<8x8xbf16>, vector<8x8xf32> -> vector<8x8xf32>
    %67 = arith.addf %66, %45 : vector<8x8xf32>
    %cst_22 = arith.constant dense<0xFF800000> : vector<8xf32>
    %68 = vector.multi_reduction <maximumf>, %67, %cst_22 [1] : vector<8x8xf32> to vector<8xf32>
    %69 = vector.shape_cast %68 : vector<8xf32> to vector<8x1xf32>
    %70 = vector.broadcast %69 : vector<8x1xf32> to vector<8x8xf32>
    %71 = arith.subf %67, %70 : vector<8x8xf32>
    %72 = math.exp %71 : vector<8x8xf32>
    %cst_23 = arith.constant dense<0.000000e+00> : vector<8xf32>
    %73 = vector.multi_reduction <add>, %72, %cst_23 [1] : vector<8x8xf32> to vector<8xf32>
    %74 = vector.shape_cast %73 : vector<8xf32> to vector<8x1xf32>
    %75 = tpu.reciprocal %74 : vector<8x1xf32> -> vector<8x1xf32>
    %76 = vector.broadcast %75 : vector<8x1xf32> to vector<8x8xf32>
    %77 = arith.mulf %72, %76 : vector<8x8xf32>
    %78 = arith.truncf %77 : vector<8x8xf32> to vector<8x8xbf16>
    %cst_24 = arith.constant dense<0.000000e+00> : vector<8x8xf32>
    %79 = tpu.matmul %78, %65, %cst_24 {dimension_numbers = #tpu.dot_dimension_numbers<[1], [0], [0], [1], [0, 0, 1, 1], [], []>} : vector<8x8xbf16>, vector<8x8xbf16>, vector<8x8xf32> -> vector<8x8xf32>
    %80 = vector.extract_strided_slice %33 {offsets = [0, 16], sizes = [8, 8], strides = [1, 1]} : vector<8x32xbf16> to vector<8x8xbf16>
    %81 = vector.extract_strided_slice %35 {offsets = [0, 16], sizes = [8, 8], strides = [1, 1]} : vector<8x32xbf16> to vector<8x8xbf16>
    %82 = vector.extract_strided_slice %37 {offsets = [0, 16], sizes = [8, 8], strides = [1, 1]} : vector<8x32xbf16> to vector<8x8xbf16>
    %cst_25 = arith.constant dense<0.000000e+00> : vector<8x8xf32>
    %83 = tpu.matmul %80, %81, %cst_25 {dimension_numbers = #tpu.dot_dimension_numbers<[1], [1], [0], [0], [0, 0, 1, 0], [], []>} : vector<8x8xbf16>, vector<8x8xbf16>, vector<8x8xf32> -> vector<8x8xf32>
    %84 = arith.addf %83, %45 : vector<8x8xf32>
    %cst_26 = arith.constant dense<0xFF800000> : vector<8xf32>
    %85 = vector.multi_reduction <maximumf>, %84, %cst_26 [1] : vector<8x8xf32> to vector<8xf32>
    %86 = vector.shape_cast %85 : vector<8xf32> to vector<8x1xf32>
    %87 = vector.broadcast %86 : vector<8x1xf32> to vector<8x8xf32>
    %88 = arith.subf %84, %87 : vector<8x8xf32>
    %89 = math.exp %88 : vector<8x8xf32>
    %cst_27 = arith.constant dense<0.000000e+00> : vector<8xf32>
    %90 = vector.multi_reduction <add>, %89, %cst_27 [1] : vector<8x8xf32> to vector<8xf32>
    %91 = vector.shape_cast %90 : vector<8xf32> to vector<8x1xf32>
    %92 = tpu.reciprocal %91 : vector<8x1xf32> -> vector<8x1xf32>
    %93 = vector.broadcast %92 : vector<8x1xf32> to vector<8x8xf32>
    %94 = arith.mulf %89, %93 : vector<8x8xf32>
    %95 = arith.truncf %94 : vector<8x8xf32> to vector<8x8xbf16>
    %cst_28 = arith.constant dense<0.000000e+00> : vector<8x8xf32>
    %96 = tpu.matmul %95, %82, %cst_28 {dimension_numbers = #tpu.dot_dimension_numbers<[1], [0], [0], [1], [0, 0, 1, 1], [], []>} : vector<8x8xbf16>, vector<8x8xbf16>, vector<8x8xf32> -> vector<8x8xf32>
    %97 = vector.extract_strided_slice %33 {offsets = [0, 24], sizes = [8, 8], strides = [1, 1]} : vector<8x32xbf16> to vector<8x8xbf16>
    %98 = vector.extract_strided_slice %35 {offsets = [0, 24], sizes = [8, 8], strides = [1, 1]} : vector<8x32xbf16> to vector<8x8xbf16>
    %99 = vector.extract_strided_slice %37 {offsets = [0, 24], sizes = [8, 8], strides = [1, 1]} : vector<8x32xbf16> to vector<8x8xbf16>
    %cst_29 = arith.constant dense<0.000000e+00> : vector<8x8xf32>
    %100 = tpu.matmul %97, %98, %cst_29 {dimension_numbers = #tpu.dot_dimension_numbers<[1], [1], [0], [0], [0, 0, 1, 0], [], []>} : vector<8x8xbf16>, vector<8x8xbf16>, vector<8x8xf32> -> vector<8x8xf32>
    %101 = arith.addf %100, %45 : vector<8x8xf32>
    %cst_30 = arith.constant dense<0xFF800000> : vector<8xf32>
    %102 = vector.multi_reduction <maximumf>, %101, %cst_30 [1] : vector<8x8xf32> to vector<8xf32>
    %103 = vector.shape_cast %102 : vector<8xf32> to vector<8x1xf32>
    %104 = vector.broadcast %103 : vector<8x1xf32> to vector<8x8xf32>
    %105 = arith.subf %101, %104 : vector<8x8xf32>
    %106 = math.exp %105 : vector<8x8xf32>
    %cst_31 = arith.constant dense<0.000000e+00> : vector<8xf32>
    %107 = vector.multi_reduction <add>, %106, %cst_31 [1] : vector<8x8xf32> to vector<8xf32>
    %108 = vector.shape_cast %107 : vector<8xf32> to vector<8x1xf32>
    %109 = tpu.reciprocal %108 : vector<8x1xf32> -> vector<8x1xf32>
    %110 = vector.broadcast %109 : vector<8x1xf32> to vector<8x8xf32>
    %111 = arith.mulf %106, %110 : vector<8x8xf32>
    %112 = arith.truncf %111 : vector<8x8xf32> to vector<8x8xbf16>
    %cst_32 = arith.constant dense<0.000000e+00> : vector<8x8xf32>
    %113 = tpu.matmul %112, %99, %cst_32 {dimension_numbers = #tpu.dot_dimension_numbers<[1], [0], [0], [1], [0, 0, 1, 1], [], []>} : vector<8x8xbf16>, vector<8x8xbf16>, vector<8x8xf32> -> vector<8x8xf32>
    %114 = tpu.concatenate %62, %79, %96, %113 in 1 : vector<8x8xf32>, vector<8x8xf32>, vector<8x8xf32>, vector<8x8xf32> -> vector<8x32xf32>
    %115 = arith.truncf %114 : vector<8x32xf32> to vector<8x32xbf16>
    %c0_33 = arith.constant 0 : index
    %c0_34 = arith.constant 0 : index
    %116 = vector.load %arg4[%c0_33, %c0_34] : memref<32x32xbf16, #tpu.memory_space<vmem>>, vector<32x32xbf16>
    %cst_35 = arith.constant dense<0.000000e+00> : vector<8x32xf32>
    %117 = tpu.matmul %115, %116, %cst_35 {dimension_numbers = #tpu.dot_dimension_numbers<[1], [0], [0], [1], [0, 0, 1, 1], [], []>} : vector<8x32xbf16>, vector<32x32xbf16>, vector<8x32xf32> -> vector<8x32xf32>
    %c0_36 = arith.constant 0 : index
    %c0_37 = arith.constant 0 : index
    %118 = vector.load %arg5[%c0_36, %c0_37] : memref<1x32xf32, #tpu.memory_space<vmem>>, vector<1x32xf32>
    %119 = vector.broadcast %118 : vector<1x32xf32> to vector<8x32xf32>
    %120 = arith.addf %117, %119 : vector<8x32xf32>
    %121 = arith.addf %120, %1 : vector<8x32xf32>
    %c0_38 = arith.constant 0 : index
    %c0_39 = arith.constant 0 : index
    %122 = vector.load %arg8[%c0_38, %c0_39] : memref<1x32xf32, #tpu.memory_space<vmem>>, vector<1x32xf32>
    %c0_40 = arith.constant 0 : index
    %c0_41 = arith.constant 0 : index
    %123 = vector.load %arg9[%c0_40, %c0_41] : memref<1x32xf32, #tpu.memory_space<vmem>>, vector<1x32xf32>
    %cst_42 = arith.constant dense<0.000000e+00> : vector<8xf32>
    %124 = vector.multi_reduction <add>, %121, %cst_42 [1] : vector<8x32xf32> to vector<8xf32>
    %125 = vector.shape_cast %124 : vector<8xf32> to vector<8x1xf32>
    %cst_43 = arith.constant 3.200000e+01 : f32
    %126 = vector.broadcast %cst_43 : f32 to vector<8x1xf32>
    %127 = arith.divf %125, %126 : vector<8x1xf32>
    %128 = vector.broadcast %127 : vector<8x1xf32> to vector<8x32xf32>
    %129 = arith.subf %121, %128 : vector<8x32xf32>
    %130 = arith.mulf %129, %129 : vector<8x32xf32>
    %cst_44 = arith.constant dense<0.000000e+00> : vector<8xf32>
    %131 = vector.multi_reduction <add>, %130, %cst_44 [1] : vector<8x32xf32> to vector<8xf32>
    %132 = vector.shape_cast %131 : vector<8xf32> to vector<8x1xf32>
    %cst_45 = arith.constant 3.200000e+01 : f32
    %133 = vector.broadcast %cst_45 : f32 to vector<8x1xf32>
    %134 = arith.divf %132, %133 : vector<8x1xf32>
    %135 = vector.broadcast %127 : vector<8x1xf32> to vector<8x32xf32>
    %136 = arith.subf %121, %135 : vector<8x32xf32>
    %cst_46 = arith.constant 9.99999974E-6 : f32
    %137 = vector.broadcast %cst_46 : f32 to vector<8x1xf32>
    %138 = arith.addf %134, %137 : vector<8x1xf32>
    %139 = math.rsqrt %138 : vector<8x1xf32>
    %140 = vector.broadcast %139 : vector<8x1xf32> to vector<8x32xf32>
    %141 = arith.mulf %136, %140 : vector<8x32xf32>
    %142 = vector.broadcast %122 : vector<1x32xf32> to vector<8x32xf32>
    %143 = arith.mulf %141, %142 : vector<8x32xf32>
    %144 = vector.broadcast %123 : vector<1x32xf32> to vector<8x32xf32>
    %145 = arith.addf %143, %144 : vector<8x32xf32>
    %c0_47 = arith.constant 0 : index
    %c0_48 = arith.constant 0 : index
    %146 = vector.load %arg10[%c0_47, %c0_48] : memref<1x32xf32, #tpu.memory_space<vmem>>, vector<1x32xf32>
    %c0_49 = arith.constant 0 : index
    %c0_50 = arith.constant 0 : index
    %147 = vector.load %arg11[%c0_49, %c0_50] : memref<1x32xf32, #tpu.memory_space<vmem>>, vector<1x32xf32>
    %cst_51 = arith.constant dense<0.000000e+00> : vector<8xf32>
    %148 = vector.multi_reduction <add>, %145, %cst_51 [1] : vector<8x32xf32> to vector<8xf32>
    %149 = vector.shape_cast %148 : vector<8xf32> to vector<8x1xf32>
    %cst_52 = arith.constant 3.200000e+01 : f32
    %150 = vector.broadcast %cst_52 : f32 to vector<8x1xf32>
    %151 = arith.divf %149, %150 : vector<8x1xf32>
    %152 = vector.broadcast %151 : vector<8x1xf32> to vector<8x32xf32>
    %153 = arith.subf %145, %152 : vector<8x32xf32>
    %154 = arith.mulf %153, %153 : vector<8x32xf32>
    %cst_53 = arith.constant dense<0.000000e+00> : vector<8xf32>
    %155 = vector.multi_reduction <add>, %154, %cst_53 [1] : vector<8x32xf32> to vector<8xf32>
    %156 = vector.shape_cast %155 : vector<8xf32> to vector<8x1xf32>
    %cst_54 = arith.constant 3.200000e+01 : f32
    %157 = vector.broadcast %cst_54 : f32 to vector<8x1xf32>
    %158 = arith.divf %156, %157 : vector<8x1xf32>
    %159 = vector.broadcast %151 : vector<8x1xf32> to vector<8x32xf32>
    %160 = arith.subf %145, %159 : vector<8x32xf32>
    %cst_55 = arith.constant 9.99999974E-6 : f32
    %161 = vector.broadcast %cst_55 : f32 to vector<8x1xf32>
    %162 = arith.addf %158, %161 : vector<8x1xf32>
    %163 = math.rsqrt %162 : vector<8x1xf32>
    %164 = vector.broadcast %163 : vector<8x1xf32> to vector<8x32xf32>
    %165 = arith.mulf %160, %164 : vector<8x32xf32>
    %166 = vector.broadcast %146 : vector<1x32xf32> to vector<8x32xf32>
    %167 = arith.mulf %165, %166 : vector<8x32xf32>
    %168 = vector.broadcast %147 : vector<1x32xf32> to vector<8x32xf32>
    %169 = arith.addf %167, %168 : vector<8x32xf32>
    %170 = arith.truncf %169 : vector<8x32xf32> to vector<8x32xbf16>
    %c0_56 = arith.constant 0 : index
    %c0_57 = arith.constant 0 : index
    %171 = vector.load %arg12[%c0_56, %c0_57] : memref<32x64xbf16, #tpu.memory_space<vmem>>, vector<32x64xbf16>
    %cst_58 = arith.constant dense<0.000000e+00> : vector<8x64xf32>
    %172 = tpu.matmul %170, %171, %cst_58 {dimension_numbers = #tpu.dot_dimension_numbers<[1], [0], [0], [1], [0, 0, 1, 1], [], []>} : vector<8x32xbf16>, vector<32x64xbf16>, vector<8x64xf32> -> vector<8x64xf32>
    %c0_59 = arith.constant 0 : index
    %c0_60 = arith.constant 0 : index
    %173 = vector.load %arg13[%c0_59, %c0_60] : memref<1x64xf32, #tpu.memory_space<vmem>>, vector<1x64xf32>
    %174 = vector.broadcast %173 : vector<1x64xf32> to vector<8x64xf32>
    %175 = arith.addf %172, %174 : vector<8x64xf32>
    %cst_61 = arith.constant 5.000000e-01 : f32
    %176 = vector.broadcast %cst_61 : f32 to vector<8x64xf32>
    %177 = arith.mulf %176, %175 : vector<8x64xf32>
    %cst_62 = arith.constant 0.707106769 : f32
    %178 = vector.broadcast %cst_62 : f32 to vector<8x64xf32>
    %179 = arith.mulf %175, %178 : vector<8x64xf32>
    %cst_63 = arith.constant 0.000000e+00 : f32
    %180 = vector.broadcast %cst_63 : f32 to vector<8x64xf32>
    %181 = arith.cmpf oge, %179, %180 : vector<8x64xf32>
    %cst_64 = arith.constant 1.000000e+00 : f32
    %cst_65 = arith.constant -1.000000e+00 : f32
    %182 = vector.broadcast %cst_64 : f32 to vector<8x64xf32>
    %183 = vector.broadcast %cst_65 : f32 to vector<8x64xf32>
    %184 = arith.select %181, %182, %183 : vector<8x64xi1>, vector<8x64xf32>
    %185 = math.absf %179 : vector<8x64xf32>
    %cst_66 = arith.constant 0.327591091 : f32
    %186 = vector.broadcast %cst_66 : f32 to vector<8x64xf32>
    %187 = arith.mulf %186, %185 : vector<8x64xf32>
    %cst_67 = arith.constant 1.000000e+00 : f32
    %188 = vector.broadcast %cst_67 : f32 to vector<8x64xf32>
    %189 = arith.addf %188, %187 : vector<8x64xf32>
    %cst_68 = arith.constant 1.000000e+00 : f32
    %190 = vector.broadcast %cst_68 : f32 to vector<8x64xf32>
    %191 = arith.divf %190, %189 : vector<8x64xf32>
    %cst_69 = arith.constant 1.06140542 : f32
    %192 = vector.broadcast %cst_69 : f32 to vector<8x64xf32>
    %193 = arith.mulf %192, %191 : vector<8x64xf32>
    %cst_70 = arith.constant -1.45315206 : f32
    %194 = vector.broadcast %cst_70 : f32 to vector<8x64xf32>
    %195 = arith.addf %193, %194 : vector<8x64xf32>
    %196 = arith.mulf %195, %191 : vector<8x64xf32>
    %cst_71 = arith.constant 1.42141378 : f32
    %197 = vector.broadcast %cst_71 : f32 to vector<8x64xf32>
    %198 = arith.addf %196, %197 : vector<8x64xf32>
    %199 = arith.mulf %198, %191 : vector<8x64xf32>
    %cst_72 = arith.constant -0.284496725 : f32
    %200 = vector.broadcast %cst_72 : f32 to vector<8x64xf32>
    %201 = arith.addf %199, %200 : vector<8x64xf32>
    %202 = arith.mulf %201, %191 : vector<8x64xf32>
    %cst_73 = arith.constant 0.254829586 : f32
    %203 = vector.broadcast %cst_73 : f32 to vector<8x64xf32>
    %204 = arith.addf %202, %203 : vector<8x64xf32>
    %205 = arith.mulf %204, %191 : vector<8x64xf32>
    %cst_74 = arith.constant 0.000000e+00 : f32
    %206 = vector.broadcast %cst_74 : f32 to vector<8x64xf32>
    %207 = arith.subf %206, %185 : vector<8x64xf32>
    %208 = arith.mulf %207, %185 : vector<8x64xf32>
    %209 = math.exp %208 : vector<8x64xf32>
    %210 = arith.mulf %205, %209 : vector<8x64xf32>
    %cst_75 = arith.constant 1.000000e+00 : f32
    %211 = vector.broadcast %cst_75 : f32 to vector<8x64xf32>
    %212 = arith.subf %211, %210 : vector<8x64xf32>
    %213 = arith.mulf %184, %212 : vector<8x64xf32>
    %cst_76 = arith.constant 1.000000e+00 : f32
    %214 = vector.broadcast %cst_76 : f32 to vector<8x64xf32>
    %215 = arith.addf %214, %213 : vector<8x64xf32>
    %216 = arith.mulf %177, %215 : vector<8x64xf32>
    %217 = arith.truncf %216 : vector<8x64xf32> to vector<8x64xbf16>
    %c0_77 = arith.constant 0 : index
    %c0_78 = arith.constant 0 : index
    %218 = vector.load %arg14[%c0_77, %c0_78] : memref<64x32xbf16, #tpu.memory_space<vmem>>, vector<64x32xbf16>
    %cst_79 = arith.constant dense<0.000000e+00> : vector<8x32xf32>
    %219 = tpu.matmul %217, %218, %cst_79 {dimension_numbers = #tpu.dot_dimension_numbers<[1], [0], [0], [1], [0, 0, 1, 1], [], []>} : vector<8x64xbf16>, vector<64x32xbf16>, vector<8x32xf32> -> vector<8x32xf32>
    %c0_80 = arith.constant 0 : index
    %c0_81 = arith.constant 0 : index
    %220 = vector.load %arg15[%c0_80, %c0_81] : memref<1x32xf32, #tpu.memory_space<vmem>>, vector<1x32xf32>
    %221 = vector.broadcast %220 : vector<1x32xf32> to vector<8x32xf32>
    %222 = arith.addf %219, %221 : vector<8x32xf32>
    %223 = arith.addf %222, %121 : vector<8x32xf32>
    %c0_82 = arith.constant 0 : index
    %c0_83 = arith.constant 0 : index
    %c0_84 = arith.constant 0 : index
    %224 = vector.load %arg16[%c0_82, %c0_83, %c0_84] : memref<1x8x32xf32, #tpu.memory_space<vmem>>, vector<1x8x32xf32>
    %225 = vector.shape_cast %224 : vector<1x8x32xf32> to vector<8x32xf32>
    %226 = vector.shape_cast %223 : vector<8x32xf32> to vector<1x8x32xf32>
    tpu.vector_store %arg16[%c0_82, %c0_83, %c0_84], %226 {strides = array<i32>} : memref<1x8x32xf32, #tpu.memory_space<vmem>>, vector<1x8x32xf32>,
    return
  }
  func.func @transform_0(%arg0: i32) -> (i32, i32, i32) {
    %c0_i32 = arith.constant 0 : i32
    %c0_i32_0 = arith.constant 0 : i32
    %c0_i32_1 = arith.constant 0 : i32
    return %arg0, %c0_i32, %c0_i32_0 : i32, i32, i32
  }
  func.func @transform_1(%arg0: i32) -> (i32, i32) {
    %c0_i32 = arith.constant 0 : i32
    %c0_i32_0 = arith.constant 0 : i32
    %c0_i32_1 = arith.constant 0 : i32
    return %c0_i32, %c0_i32_0 : i32, i32
  }
  func.func @transform_2(%arg0: i32) -> (i32, i32) {
    %c0_i32 = arith.constant 0 : i32
    %c0_i32_0 = arith.constant 0 : i32
    %c0_i32_1 = arith.constant 0 : i32
    return %c0_i32, %c0_i32_0 : i32, i32
  }
  func.func @transform_3(%arg0: i32) -> (i32, i32) {
    %c0_i32 = arith.constant 0 : i32
    %c0_i32_0 = arith.constant 0 : i32
    %c0_i32_1 = arith.constant 0 : i32
    return %c0_i32, %c0_i32_0 : i32, i32
  }
  func.func @transform_4(%arg0: i32) -> (i32, i32) {
    %c0_i32 = arith.constant 0 : i32
    %c0_i32_0 = arith.constant 0 : i32
    %c0_i32_1 = arith.constant 0 : i32
    return %c0_i32, %c0_i32_0 : i32, i32
  }
  func.func @transform_5(%arg0: i32) -> (i32, i32) {
    %c0_i32 = arith.constant 0 : i32
    %c0_i32_0 = arith.constant 0 : i32
    %c0_i32_1 = arith.constant 0 : i32
    return %c0_i32, %c0_i32_0 : i32, i32
  }
  func.func @transform_6(%arg0: i32) -> (i32, i32) {
    %c0_i32 = arith.constant 0 : i32
    %c0_i32_0 = arith.constant 0 : i32
    %c0_i32_1 = arith.constant 0 : i32
    return %c0_i32, %c0_i32_0 : i32, i32
  }
  func.func @transform_7(%arg0: i32) -> (i32, i32) {
    %c0_i32 = arith.constant 0 : i32
    %c0_i32_0 = arith.constant 0 : i32
    %c0_i32_1 = arith.constant 0 : i32
    return %c0_i32, %c0_i32_0 : i32, i32
  }
  func.func @transform_8(%arg0: i32) -> (i32, i32) {
    %c0_i32 = arith.constant 0 : i32
    %c0_i32_0 = arith.constant 0 : i32
    %c0_i32_1 = arith.constant 0 : i32
    return %c0_i32, %c0_i32_0 : i32, i32
  }
  func.func @transform_9(%arg0: i32) -> (i32, i32) {
    %c0_i32 = arith.constant 0 : i32
    %c0_i32_0 = arith.constant 0 : i32
    %c0_i32_1 = arith.constant 0 : i32
    return %c0_i32, %c0_i32_0 : i32, i32
  }
  func.func @transform_10(%arg0: i32) -> (i32, i32) {
    %c0_i32 = arith.constant 0 : i32
    %c0_i32_0 = arith.constant 0 : i32
    %c0_i32_1 = arith.constant 0 : i32
    return %c0_i32, %c0_i32_0 : i32, i32
  }
  func.func @transform_11(%arg0: i32) -> (i32, i32) {
    %c0_i32 = arith.constant 0 : i32
    %c0_i32_0 = arith.constant 0 : i32
    %c0_i32_1 = arith.constant 0 : i32
    return %c0_i32, %c0_i32_0 : i32, i32
  }
  func.func @transform_12(%arg0: i32) -> (i32, i32) {
    %c0_i32 = arith.constant 0 : i32
    %c0_i32_0 = arith.constant 0 : i32
    %c0_i32_1 = arith.constant 0 : i32
    return %c0_i32, %c0_i32_0 : i32, i32
  }
  func.func @transform_13(%arg0: i32) -> (i32, i32) {
    %c0_i32 = arith.constant 0 : i32
    %c0_i32_0 = arith.constant 0 : i32
    %c0_i32_1 = arith.constant 0 : i32
    return %c0_i32, %c0_i32_0 : i32, i32
  }
  func.func @transform_14(%arg0: i32) -> (i32, i32) {
    %c0_i32 = arith.constant 0 : i32
    %c0_i32_0 = arith.constant 0 : i32
    %c0_i32_1 = arith.constant 0 : i32
    return %c0_i32, %c0_i32_0 : i32, i32
  }
  func.func @transform_15(%arg0: i32) -> (i32, i32, i32) {
    %c0_i32 = arith.constant 0 : i32
    %c0_i32_0 = arith.constant 0 : i32
    %c0_i32_1 = arith.constant 0 : i32
    return %arg0, %c0_i32, %c0_i32_0 : i32, i32, i32
  }
}

</mosaic_0001>

<llo_original>
// kernel: tpu_custom_call.1
$region0: #{tpu_custom_call.1}
  #allocation0 [shape = 'u32[]', space=smem, size = 0x4, offset = 0x4, fixed_abs, tag = 'smem constant byte address 0x4 - core index']
  #allocation1 [shape = 'u32[144,128]{1,0:T(1,128)}', space=vmem, size = 0x12000, scoped, tag = 'internal scratch']
  %s0 = inlined_call_operand.vmem [shape: f32[2,8,32], index: 0, kind: input, shape index: {}]
  %s1 = inlined_call_operand.vmem [shape: bf16[32,96], index: 1, kind: input, shape index: {}]
  %s2 = inlined_call_operand.vmem [shape: f32[1,96], index: 2, kind: input, shape index: {}]
  %s3 = inlined_call_operand.vmem [shape: bf16[32,32], index: 3, kind: input, shape index: {}]
  %s4 = inlined_call_operand.vmem [shape: f32[1,32], index: 4, kind: input, shape index: {}]
  %s5 = inlined_call_operand.hbm [shape: f32[1,32], index: 5, kind: input, shape index: {}]
  %s6 = inlined_call_operand.hbm [shape: f32[1,32], index: 6, kind: input, shape index: {}]
  %s7 = inlined_call_operand.hbm [shape: f32[1,32], index: 7, kind: input, shape index: {}]
  %s8 = inlined_call_operand.hbm [shape: f32[1,32], index: 8, kind: input, shape index: {}]
  %s9 = inlined_call_operand.hbm [shape: f32[1,32], index: 9, kind: input, shape index: {}]
  %s10 = inlined_call_operand.vmem [shape: f32[1,32], index: 10, kind: input, shape index: {}]
  %s11 = inlined_call_operand.vmem [shape: bf16[32,64], index: 11, kind: input, shape index: {}]
  %s12 = inlined_call_operand.vmem [shape: f32[1,64], index: 12, kind: input, shape index: {}]
  %s13 = inlined_call_operand.vmem [shape: bf16[64,32], index: 13, kind: input, shape index: {}]
  %s14 = inlined_call_operand.vmem [shape: f32[1,32], index: 14, kind: input, shape index: {}]
  %s15 = inlined_call_operand.hbm [shape: f32[2,8,32], index: 15, kind: output, shape index: {}]
  %s16 = sld [smem:[#allocation0]]
  $region113: #{tpu_custom_call.1} parent=0
    _
  %s18 = ssub.s32 1, %s16
  %s19 = scalar_select 0, %s18, %s16
  $region1: #{tpu_custom_call.1} parent=0
    #allocation2 [shape = 'u8[512]{0}', space=vmem, size = 0x400, scoped, tag = 'input window, operand 5, single buffered']
    #allocation3 [shape = 's32[2]{0}', space=sflag, size = 0x8, scoped, tag = 'scoped memory for tpu_custom_call.1']
    #allocation4 [shape = 's32[2]{0}', space=sflag, size = 0x8, scoped, tag = 'scoped memory for tpu_custom_call.1']
    #allocation5 [shape = 'u8[512]{0}', space=vmem, size = 0x400, scoped, tag = 'input window, operand 6, single buffered']
    #allocation6 [shape = 's32[1]{0}', space=sflag, size = 0x4, scoped, tag = 'scoped memory for tpu_custom_call.1']
    #allocation7 [shape = 'u8[512]{0}', space=vmem, size = 0x400, scoped, tag = 'input window, operand 7, single buffered']
    #allocation8 [shape = 'u8[512]{0}', space=vmem, size = 0x400, scoped, tag = 'input window, operand 8, single buffered']
    #allocation9 [shape = 's32[1]{0}', space=sflag, size = 0x4, scoped, tag = 'scoped memory for tpu_custom_call.1']
    #allocation10 [shape = 'u8[512]{0}', space=vmem, size = 0x400, scoped, tag = 'input window, operand 9, single buffered']
    #allocation11 [shape = 'u8[8192]{0}', space=vmem, size = 0x2000, scoped, tag = 'output window, operand 0']
    %20 = vsyncpa [#allocation3], 0
    %21 = vsyncpa [#allocation6], 0
    %22 = vsyncpa [#allocation9], 0
    %23 = vsyncpa [#allocation4], 0
    %s24 = scalar_lea.sflag [#allocation4], 1
    %25 = vsyncpa %s24, 0
    loop: start=0, step=1, limit=4
    $region2: #{tpu_custom_call.1} parent=1 // loop_pre_header
      _
    $region3: #{tpu_custom_call.1} parent=1 // loop_header
      %s27 = sphi 0, %s31
      %p28 = scmp.ge.s32.totalorder %s27, 4
      %s37 = sphi 0, %s39
      %s40 = sphi 0, %s37
      %s41 = sphi 0, %s40
      %s57 = sphi 0, %s41
      %s61 = sphi 0, %s61
      %s63 = sphi 0, %s61
      %s64 = sphi 0, %s63
      %s78 = sphi 0, %s64
      %s82 = sphi 0, %s82
      %s84 = sphi 0, %s82
      %s85 = sphi 0, %s84
      %s99 = sphi 0, %s85
      %s103 = sphi 0, %s103
      %s105 = sphi 0, %s103
      %s106 = sphi 0, %s105
      %s120 = sphi 0, %s106
      %s124 = sphi 0, %s124
      %s126 = sphi 0, %s124
      %s127 = sphi 0, %s126
      %s141 = sphi 0, %s127
      %s145 = sphi 0, %s145
      %s147 = sphi 0, %s145
      %s148 = sphi 0, %s147
      %s162 = sphi 0, %s148
      %s166 = sphi 0, %s166
      %s168 = sphi 0, %s166
      %s169 = sphi 0, %s168
      %s183 = sphi 0, %s169
      %s187 = sphi 0, %s187
      %s189 = sphi 0, %s187
      %s190 = sphi 0, %s189
      %s204 = sphi 0, %s190
      %s208 = sphi 0, %s208
      %s210 = sphi 0, %s208
      %s211 = sphi 0, %s210
      %s225 = sphi 0, %s211
      %s229 = sphi 0, %s229
      %s231 = sphi 0, %s229
      %s232 = sphi 0, %s231
      %s246 = sphi 0, %s232
      %s250 = sphi 0, %s250
      %s252 = sphi 0, %s250
      %s253 = sphi 0, %s252
      %s267 = sphi 0, %s253
      %s271 = sphi 0, %s271
      %s273 = sphi 0, %s271
      %s274 = sphi 0, %s273
      %s288 = sphi 0, %s274
      %s292 = sphi 0, %s292
      %s294 = sphi 0, %s292
      %s295 = sphi 0, %s294
      %s309 = sphi 0, %s295
      %s313 = sphi 0, %s313
      %s315 = sphi 0, %s313
      %s316 = sphi 0, %s315
      %s330 = sphi 0, %s316
      %s334 = sphi 0, %s334
      %s336 = sphi 0, %s334
      %s337 = sphi 0, %s336
      %s351 = sphi 0, %s337
      %s357 = sphi 0, %s359
      %s360 = sphi 0, %s357
      %s361 = sphi 0, %s360
      %s377 = sphi 0, %s361
    $region4: #{tpu_custom_call.1} parent=1 // loop_header_branch
      %30 = sbr.rel (%p28) target = $region8
    $region5: #{tpu_custom_call.1} parent=1 // loop_body
      %s32 = ssub.s32 %s27, 1
      %s33 = ssub.s32 %s27, 2
      %s34 = sadd.s32 %s27, 1
      %s35 = ssub.s32 %s27, %s34
      %p36 = scmp.eq.s32.totalorder %s35, 0
      %s38 = sadd.s32 %s37, 1
      %s39 = scalar_select %p36, %s37, %s38
      %p42 = pneg %p36
      %p43 = scmp.eq.s32.totalorder %s27, 1
      %p44 = por %p42, %p43
      %p45 = scmp.ne.s32.totalorder %s37, %s40
      %p46 = scmp.eq.s32.totalorder %s27, 0
      %p47 = por %p45, %p46
      %p48 = scmp.ne.s32.totalorder %s37, %s40
      %p49 = scmp.eq.s32.totalorder %s32, 1
      %p50 = por %p48, %p49
      %p51 = scmp.ne.s32.totalorder %s40, %s41
      %p52 = scmp.eq.s32.totalorder %s32, 0
      %p53 = por %p51, %p52
      %p54 = scmp.ne.s32.totalorder %s40, %s41
      %p55 = scmp.eq.s32.totalorder %s33, 1
      %p56 = por %p54, %p55
      %p58 = scmp.ne.s32.totalorder %s41, %s57
      %p59 = scmp.eq.s32.totalorder %s33, 0
      %p60 = por %p58, %p59
      %s62 = sadd.s32 %s61, 1
      %p65 = scmp.eq.s32.totalorder %s27, 1
      %p66 = scmp.ne.s32.totalorder %s61, %s63
      %p67 = scmp.eq.s32.totalorder %s27, 0
      %p68 = por %p66, %p67
      %p69 = scmp.ne.s32.totalorder %s61, %s63
      %p70 = scmp.eq.s32.totalorder %s32, 1
      %p71 = por %p69, %p70
      %p72 = scmp.ne.s32.totalorder %s63, %s64
      %p73 = scmp.eq.s32.totalorder %s32, 0
      %p74 = por %p72, %p73
      %p75 = scmp.ne.s32.totalorder %s63, %s64
      %p76 = scmp.eq.s32.totalorder %s33, 1
      %p77 = por %p75, %p76
      %p79 = scmp.ne.s32.totalorder %s64, %s78
      %p80 = scmp.eq.s32.totalorder %s33, 0
      %p81 = por %p79, %p80
      %s83 = sadd.s32 %s82, 1
      %p86 = scmp.eq.s32.totalorder %s27, 1
      %p87 = scmp.ne.s32.totalorder %s82, %s84
      %p88 = scmp.eq.s32.totalorder %s27, 0
      %p89 = por %p87, %p88
      %p90 = scmp.ne.s32.totalorder %s82, %s84
      %p91 = scmp.eq.s32.totalorder %s32, 1
      %p92 = por %p90, %p91
      %p93 = scmp.ne.s32.totalorder %s84, %s85
      %p94 = scmp.eq.s32.totalorder %s32, 0
      %p95 = por %p93, %p94
      %p96 = scmp.ne.s32.totalorder %s84, %s85
      %p97 = scmp.eq.s32.totalorder %s33, 1
      %p98 = por %p96, %p97
      %p100 = scmp.ne.s32.totalorder %s85, %s99
      %p101 = scmp.eq.s32.totalorder %s33, 0
      %p102 = por %p100, %p101
      %s104 = sadd.s32 %s103, 1
      %p107 = scmp.eq.s32.totalorder %s27, 1
      %p108 = scmp.ne.s32.totalorder %s103, %s105
      %p109 = scmp.eq.s32.totalorder %s27, 0
      %p110 = por %p108, %p109
      %p111 = scmp.ne.s32.totalorder %s103, %s105
      %p112 = scmp.eq.s32.totalorder %s32, 1
      %p113 = por %p111, %p112
      %p114 = scmp.ne.s32.totalorder %s105, %s106
      %p115 = scmp.eq.s32.totalorder %s32, 0
      %p116 = por %p114, %p115
      %p117 = scmp.ne.s32.totalorder %s105, %s106
      %p118 = scmp.eq.s32.totalorder %s33, 1
      %p119 = por %p117, %p118
      %p121 = scmp.ne.s32.totalorder %s106, %s120
      %p122 = scmp.eq.s32.totalorder %s33, 0
      %p123 = por %p121, %p122
      %s125 = sadd.s32 %s124, 1
      %p128 = scmp.eq.s32.totalorder %s27, 1
      %p129 = scmp.ne.s32.totalorder %s124, %s126
      %p130 = scmp.eq.s32.totalorder %s27, 0
      %p131 = por %p129, %p130
      %p132 = scmp.ne.s32.totalorder %s124, %s126
      %p133 = scmp.eq.s32.totalorder %s32, 1
      %p134 = por %p132, %p133
      %p135 = scmp.ne.s32.totalorder %s126, %s127
      %p136 = scmp.eq.s32.totalorder %s32, 0
      %p137 = por %p135, %p136
      %p138 = scmp.ne.s32.totalorder %s126, %s127
      %p139 = scmp.eq.s32.totalorder %s33, 1
      %p140 = por %p138, %p139
      %p142 = scmp.ne.s32.totalorder %s127, %s141
      %p143 = scmp.eq.s32.totalorder %s33, 0
      %p144 = por %p142, %p143
      %s146 = sadd.s32 %s145, 1
      %p149 = scmp.eq.s32.totalorder %s27, 1
      %p150 = scmp.ne.s32.totalorder %s145, %s147
      %p151 = scmp.eq.s32.totalorder %s27, 0
      %p152 = por %p150, %p151
      %p153 = scmp.ne.s32.totalorder %s145, %s147
      %p154 = scmp.eq.s32.totalorder %s32, 1
      %p155 = por %p153, %p154
      %p156 = scmp.ne.s32.totalorder %s147, %s148
      %p157 = scmp.eq.s32.totalorder %s32, 0
      %p158 = por %p156, %p157
      %p159 = scmp.ne.s32.totalorder %s147, %s148
      %p160 = scmp.eq.s32.totalorder %s33, 1
      %p161 = por %p159, %p160
      %p163 = scmp.ne.s32.totalorder %s148, %s162
      %p164 = scmp.eq.s32.totalorder %s33, 0
      %p165 = por %p163, %p164
      %s167 = sadd.s32 %s166, 1
      %p170 = scmp.eq.s32.totalorder %s27, 1
      %p171 = scmp.ne.s32.totalorder %s166, %s168
      %p172 = scmp.eq.s32.totalorder %s27, 0
      %p173 = por %p171, %p172
      %p174 = scmp.ne.s32.totalorder %s166, %s168
      %p175 = scmp.eq.s32.totalorder %s32, 1
      %p176 = por %p174, %p175
      %p177 = scmp.ne.s32.totalorder %s168, %s169
      %p178 = scmp.eq.s32.totalorder %s32, 0
      %p179 = por %p177, %p178
      %p180 = scmp.ne.s32.totalorder %s168, %s169
      %p181 = scmp.eq.s32.totalorder %s33, 1
      %p182 = por %p180, %p181
      %p184 = scmp.ne.s32.totalorder %s169, %s183
      %p185 = scmp.eq.s32.totalorder %s33, 0
      %p186 = por %p184, %p185
      %s188 = sadd.s32 %s187, 1
      %p191 = scmp.eq.s32.totalorder %s27, 1
      %p192 = scmp.ne.s32.totalorder %s187, %s189
      %p193 = scmp.eq.s32.totalorder %s27, 0
      %p194 = por %p192, %p193
      %p195 = scmp.ne.s32.totalorder %s187, %s189
      %p196 = scmp.eq.s32.totalorder %s32, 1
      %p197 = por %p195, %p196
      %p198 = scmp.ne.s32.totalorder %s189, %s190
      %p199 = scmp.eq.s32.totalorder %s32, 0
      %p200 = por %p198, %p199
      %p201 = scmp.ne.s32.totalorder %s189, %s190
      %p202 = scmp.eq.s32.totalorder %s33, 1
      %p203 = por %p201, %p202
      %p205 = scmp.ne.s32.totalorder %s190, %s204
      %p206 = scmp.eq.s32.totalorder %s33, 0
      %p207 = por %p205, %p206
      %s209 = sadd.s32 %s208, 1
      %p212 = scmp.eq.s32.totalorder %s27, 1
      %p213 = scmp.ne.s32.totalorder %s208, %s210
      %p214 = scmp.eq.s32.totalorder %s27, 0
      %p215 = por %p213, %p214
      %p216 = scmp.ne.s32.totalorder %s208, %s210
      %p217 = scmp.eq.s32.totalorder %s32, 1
      %p218 = por %p216, %p217
      %p219 = scmp.ne.s32.totalorder %s210, %s211
      %p220 = scmp.eq.s32.totalorder %s32, 0
      %p221 = por %p219, %p220
      %p222 = scmp.ne.s32.totalorder %s210, %s211
      %p223 = scmp.eq.s32.totalorder %s33, 1
      %p224 = por %p222, %p223
      %p226 = scmp.ne.s32.totalorder %s211, %s225
      %p227 = scmp.eq.s32.totalorder %s33, 0
      %p228 = por %p226, %p227
      %s230 = sadd.s32 %s229, 1
      %p233 = scmp.eq.s32.totalorder %s27, 1
      %p234 = scmp.ne.s32.totalorder %s229, %s231
      %p235 = scmp.eq.s32.totalorder %s27, 0
      %p236 = por %p234, %p235
      %p237 = scmp.ne.s32.totalorder %s229, %s231
      %p238 = scmp.eq.s32.totalorder %s32, 1
      %p239 = por %p237, %p238
      %p240 = scmp.ne.s32.totalorder %s231, %s232
      %p241 = scmp.eq.s32.totalorder %s32, 0
      %p242 = por %p240, %p241
      %p243 = scmp.ne.s32.totalorder %s231, %s232
      %p244 = scmp.eq.s32.totalorder %s33, 1
      %p245 = por %p243, %p244
      %p247 = scmp.ne.s32.totalorder %s232, %s246
      %p248 = scmp.eq.s32.totalorder %s33, 0
      %p249 = por %p247, %p248
      %s251 = sadd.s32 %s250, 1
      %p254 = scmp.eq.s32.totalorder %s27, 1
      %p255 = scmp.ne.s32.totalorder %s250, %s252
      %p256 = scmp.eq.s32.totalorder %s27, 0
      %p257 = por %p255, %p256
      %p258 = scmp.ne.s32.totalorder %s250, %s252
      %p259 = scmp.eq.s32.totalorder %s32, 1
      %p260 = por %p258, %p259
      %p261 = scmp.ne.s32.totalorder %s252, %s253
      %p262 = scmp.eq.s32.totalorder %s32, 0
      %p263 = por %p261, %p262
      %p264 = scmp.ne.s32.totalorder %s252, %s253
      %p265 = scmp.eq.s32.totalorder %s33, 1
      %p266 = por %p264, %p265
      %p268 = scmp.ne.s32.totalorder %s253, %s267
      %p269 = scmp.eq.s32.totalorder %s33, 0
      %p270 = por %p268, %p269
      %s272 = sadd.s32 %s271, 1
      %p275 = scmp.eq.s32.totalorder %s27, 1
      %p276 = scmp.ne.s32.totalorder %s271, %s273
      %p277 = scmp.eq.s32.totalorder %s27, 0
      %p278 = por %p276, %p277
      %p279 = scmp.ne.s32.totalorder %s271, %s273
      %p280 = scmp.eq.s32.totalorder %s32, 1
      %p281 = por %p279, %p280
      %p282 = scmp.ne.s32.totalorder %s273, %s274
      %p283 = scmp.eq.s32.totalorder %s32, 0
      %p284 = por %p282, %p283
      %p285 = scmp.ne.s32.totalorder %s273, %s274
      %p286 = scmp.eq.s32.totalorder %s33, 1
      %p287 = por %p285, %p286
      %p289 = scmp.ne.s32.totalorder %s274, %s288
      %p290 = scmp.eq.s32.totalorder %s33, 0
      %p291 = por %p289, %p290
      %s293 = sadd.s32 %s292, 1
      %p296 = scmp.eq.s32.totalorder %s27, 1
      %p297 = scmp.ne.s32.totalorder %s292, %s294
      %p298 = scmp.eq.s32.totalorder %s27, 0
      %p299 = por %p297, %p298
      %p300 = scmp.ne.s32.totalorder %s292, %s294
      %p301 = scmp.eq.s32.totalorder %s32, 1
      %p302 = por %p300, %p301
      %p303 = scmp.ne.s32.totalorder %s294, %s295
      %p304 = scmp.eq.s32.totalorder %s32, 0
      %p305 = por %p303, %p304
      %p306 = scmp.ne.s32.totalorder %s294, %s295
      %p307 = scmp.eq.s32.totalorder %s33, 1
      %p308 = por %p306, %p307
      %p310 = scmp.ne.s32.totalorder %s295, %s309
      %p311 = scmp.eq.s32.totalorder %s33, 0
      %p312 = por %p310, %p311
      %s314 = sadd.s32 %s313, 1
      %p317 = scmp.eq.s32.totalorder %s27, 1
      %p318 = scmp.ne.s32.totalorder %s313, %s315
      %p319 = scmp.eq.s32.totalorder %s27, 0
      %p320 = por %p318, %p319
      %p321 = scmp.ne.s32.totalorder %s313, %s315
      %p322 = scmp.eq.s32.totalorder %s32, 1
      %p323 = por %p321, %p322
      %p324 = scmp.ne.s32.totalorder %s315, %s316
      %p325 = scmp.eq.s32.totalorder %s32, 0
      %p326 = por %p324, %p325
      %p327 = scmp.ne.s32.totalorder %s315, %s316
      %p328 = scmp.eq.s32.totalorder %s33, 1
      %p329 = por %p327, %p328
      %p331 = scmp.ne.s32.totalorder %s316, %s330
      %p332 = scmp.eq.s32.totalorder %s33, 0
      %p333 = por %p331, %p332
      %s335 = sadd.s32 %s334, 1
      %p338 = scmp.eq.s32.totalorder %s27, 1
      %p339 = scmp.ne.s32.totalorder %s334, %s336
      %p340 = scmp.eq.s32.totalorder %s27, 0
      %p341 = por %p339, %p340
      %p342 = scmp.ne.s32.totalorder %s334, %s336
      %p343 = scmp.eq.s32.totalorder %s32, 1
      %p344 = por %p342, %p343
      %p345 = scmp.ne.s32.totalorder %s336, %s337
      %p346 = scmp.eq.s32.totalorder %s32, 0
      %p347 = por %p345, %p346
      %p348 = scmp.ne.s32.totalorder %s336, %s337
      %p349 = scmp.eq.s32.totalorder %s33, 1
      %p350 = por %p348, %p349
      %p352 = scmp.ne.s32.totalorder %s337, %s351
      %p353 = scmp.eq.s32.totalorder %s33, 0
      %p354 = por %p352, %p353
      %s355 = ssub.s32 %s27, %s34
      %p356 = scmp.eq.s32.totalorder %s355, 0
      %s358 = sadd.s32 %s357, 1
      %s359 = scalar_select %p356, %s357, %s358
      %p362 = pneg %p356
      %p363 = scmp.eq.s32.totalorder %s27, 1
      %p364 = por %p362, %p363
      %p365 = scmp.ne.s32.totalorder %s357, %s360
      %p366 = scmp.eq.s32.totalorder %s27, 0
      %p367 = por %p365, %p366
      %p368 = scmp.ne.s32.totalorder %s357, %s360
      %p369 = scmp.eq.s32.totalorder %s32, 1
      %p370 = por %p368, %p369
      %p371 = scmp.ne.s32.totalorder %s360, %s361
      %p372 = scmp.eq.s32.totalorder %s32, 0
      %p373 = por %p371, %p372
      %p374 = scmp.ne.s32.totalorder %s360, %s361
      %p375 = scmp.eq.s32.totalorder %s33, 1
      %p376 = por %p374, %p375
      %p378 = scmp.ne.s32.totalorder %s361, %s377
      %p379 = scmp.eq.s32.totalorder %s33, 0
      %p380 = por %p378, %p379
      %p381 = scmp.le.s32.totalorder 1, %s27
      %p382 = scmp.lt.s32.totalorder %s27, 3
      %p383 = pnand %p381, %p382
      %p384 = pneg %p383
      // Predicated region
      $region9: #{tpu_custom_call.1} parent=5 // pred_check
        _
      $region10: #{tpu_custom_call.1} parent=5 // pred_check_branch
        %386 = sbr.rel (%p383) target = $region12
      $region11: #{tpu_custom_call.1} parent=5 // pred_region
        %s387 = ssub.s32 %s27, 1
        // Predicated region
        $region13: #{tpu_custom_call.1} parent=11 // pred_check
          %p388 = pneg %p74
        $region14: #{tpu_custom_call.1} parent=11 // pred_check_branch
          %390 = sbr.rel (%p388) target = $region16
        $region15: #{tpu_custom_call.1} parent=11 // pred_region
          _
        $region16: #{tpu_custom_call.1} parent=11 // pred_fallthru
          _
        // Predicated region
        $region17: #{tpu_custom_call.1} parent=11 // pred_check
          %p391 = pneg %p95
        $region18: #{tpu_custom_call.1} parent=11 // pred_check_branch
          %393 = sbr.rel (%p391) target = $region20
        $region19: #{tpu_custom_call.1} parent=11 // pred_region
          _
        $region20: #{tpu_custom_call.1} parent=11 // pred_fallthru
          _
        // Predicated region
        $region21: #{tpu_custom_call.1} parent=11 // pred_check
          %p394 = pneg %p116
        $region22: #{tpu_custom_call.1} parent=11 // pred_check_branch
          %396 = sbr.rel (%p394) target = $region24
        $region23: #{tpu_custom_call.1} parent=11 // pred_region
          _
        $region24: #{tpu_custom_call.1} parent=11 // pred_fallthru
          _
        // Predicated region
        $region25: #{tpu_custom_call.1} parent=11 // pred_check
          %p397 = pneg %p137
        $region26: #{tpu_custom_call.1} parent=11 // pred_check_branch
          %399 = sbr.rel (%p397) target = $region28
        $region27: #{tpu_custom_call.1} parent=11 // pred_region
          _
        $region28: #{tpu_custom_call.1} parent=11 // pred_fallthru
          _
        // Predicated region
        $region29: #{tpu_custom_call.1} parent=11 // pred_check
          %p400 = pneg %p158
        $region30: #{tpu_custom_call.1} parent=11 // pred_check_branch
          %402 = sbr.rel (%p400) target = $region32
        $region31: #{tpu_custom_call.1} parent=11 // pred_region
          %s404 = ssub.s32 16, 16
          %405 = vsyncadd [#allocation3], %s404
          %s407 = sshll.u32 [#allocation2], 4
          %s408 = int_to_ptr.vmem [resolvable:$true] %s407
          %410 = dma.hbm_to_vmem [thread:$0]  %s5, 16, %s408, [#allocation3]
        $region32: #{tpu_custom_call.1} parent=11 // pred_fallthru
          _
        // Predicated region
        $region33: #{tpu_custom_call.1} parent=11 // pred_check
          %p411 = pneg %p179
        $region34: #{tpu_custom_call.1} parent=11 // pred_check_branch
          %413 = sbr.rel (%p411) target = $region36
        $region35: #{tpu_custom_call.1} parent=11 // pred_region
          %s415 = ssub.s32 16, 16
          %416 = vsyncadd [#allocation6], %s415
          %s418 = sshll.u32 [#allocation5], 4
          %s419 = int_to_ptr.vmem [resolvable:$true] %s418
          %421 = dma.hbm_to_vmem [thread:$0]  %s6, 16, %s419, [#allocation6]
        $region36: #{tpu_custom_call.1} parent=11 // pred_fallthru
          _
        // Predicated region
        $region37: #{tpu_custom_call.1} parent=11 // pred_check
          %p422 = pneg %p200
        $region38: #{tpu_custom_call.1} parent=11 // pred_check_branch
          %424 = sbr.rel (%p422) target = $region40
        $region39: #{tpu_custom_call.1} parent=11 // pred_region
          %s426 = ssub.s32 16, 16
          %427 = vsyncadd [#allocation6], %s426
          %s429 = sshll.u32 [#allocation7], 4
          %s430 = int_to_ptr.vmem [resolvable:$true] %s429
          %432 = dma.hbm_to_vmem [thread:$0]  %s7, 16, %s430, [#allocation6]
        $region40: #{tpu_custom_call.1} parent=11 // pred_fallthru
          _
        // Predicated region
        $region41: #{tpu_custom_call.1} parent=11 // pred_check
          %p433 = pneg %p221
        $region42: #{tpu_custom_call.1} parent=11 // pred_check_branch
          %435 = sbr.rel (%p433) target = $region44
        $region43: #{tpu_custom_call.1} parent=11 // pred_region
          %s437 = ssub.s32 16, 16
          %438 = vsyncadd [#allocation9], %s437
          %s440 = sshll.u32 [#allocation8], 4
          %s441 = int_to_ptr.vmem [resolvable:$true] %s440
          %443 = dma.hbm_to_vmem [thread:$0]  %s8, 16, %s441, [#allocation9]
        $region44: #{tpu_custom_call.1} parent=11 // pred_fallthru
          _
        // Predicated region
        $region45: #{tpu_custom_call.1} parent=11 // pred_check
          %p444 = pneg %p242
        $region46: #{tpu_custom_call.1} parent=11 // pred_check_branch
          %446 = sbr.rel (%p444) target = $region48
        $region47: #{tpu_custom_call.1} parent=11 // pred_region
          %s448 = ssub.s32 16, 16
          %449 = vsyncadd [#allocation9], %s448
          %s451 = sshll.u32 [#allocation10], 4
          %s452 = int_to_ptr.vmem [resolvable:$true] %s451
          %454 = dma.hbm_to_vmem [thread:$0]  %s9, 16, %s452, [#allocation9]
        $region48: #{tpu_custom_call.1} parent=11 // pred_fallthru
          _
        // Predicated region
        $region49: #{tpu_custom_call.1} parent=11 // pred_check
          %p455 = pneg %p263
        $region50: #{tpu_custom_call.1} parent=11 // pred_check_branch
          %457 = sbr.rel (%p455) target = $region52
        $region51: #{tpu_custom_call.1} parent=11 // pred_region
          _
        $region52: #{tpu_custom_call.1} parent=11 // pred_fallthru
          _
        // Predicated region
        $region53: #{tpu_custom_call.1} parent=11 // pred_check
          %p458 = pneg %p284
        $region54: #{tpu_custom_call.1} parent=11 // pred_check_branch
          %460 = sbr.rel (%p458) target = $region56
        $region55: #{tpu_custom_call.1} parent=11 // pred_region
          _
        $region56: #{tpu_custom_call.1} parent=11 // pred_fallthru
          _
        // Predicated region
        $region57: #{tpu_custom_call.1} parent=11 // pred_check
          %p461 = pneg %p305
        $region58: #{tpu_custom_call.1} parent=11 // pred_check_branch
          %463 = sbr.rel (%p461) target = $region60
        $region59: #{tpu_custom_call.1} parent=11 // pred_region
          _
        $region60: #{tpu_custom_call.1} parent=11 // pred_fallthru
          _
        // Predicated region
        $region61: #{tpu_custom_call.1} parent=11 // pred_check
          %p464 = pneg %p326
        $region62: #{tpu_custom_call.1} parent=11 // pred_check_branch
          %466 = sbr.rel (%p464) target = $region64
        $region63: #{tpu_custom_call.1} parent=11 // pred_region
          _
        $region64: #{tpu_custom_call.1} parent=11 // pred_fallthru
          _
        // Predicated region
        $region65: #{tpu_custom_call.1} parent=11 // pred_check
          %p467 = pneg %p347
        $region66: #{tpu_custom_call.1} parent=11 // pred_check_branch
          %469 = sbr.rel (%p467) target = $region68
        $region67: #{tpu_custom_call.1} parent=11 // pred_region
          _
        $region68: #{tpu_custom_call.1} parent=11 // pred_fallthru
          _
      $region12: #{tpu_custom_call.1} parent=5 // pred_fallthru
        _
      %p470 = scmp.lt.s32.totalorder %s27, 2
      // Predicated region
      $region69: #{tpu_custom_call.1} parent=5 // pred_check
        %p471 = pneg %p470
      $region70: #{tpu_custom_call.1} parent=5 // pred_check_branch
        %473 = sbr.rel (%p471) target = $region72
      $region71: #{tpu_custom_call.1} parent=5 // pred_region
        // Predicated region
        $region73: #{tpu_custom_call.1} parent=71 // pred_check
          %p474 = pneg %p47
        $region74: #{tpu_custom_call.1} parent=71 // pred_check_branch
          %476 = sbr.rel (%p474) target = $region76
        $region75: #{tpu_custom_call.1} parent=71 // pred_region
          %p477 = scmp.lt.s32.totalorder %s27, 1
          %s478 = scalar_select %p477, %s27, 1
          %s479 = smul.addr %s478, 8
          %s480 = scalar_lea.vmem %s0, %s479
        $region76: #{tpu_custom_call.1} parent=71 // pred_fallthru
          _
      $region72: #{tpu_custom_call.1} parent=5 // pred_fallthru
        _
      %p481 = scmp.le.s32.totalorder 1, %s27
      %p482 = scmp.lt.s32.totalorder %s27, 3
      %p483 = pnand %p481, %p482
      %p484 = pneg %p483
      // Predicated region
      $region77: #{tpu_custom_call.1} parent=5 // pred_check
        _
      $region78: #{tpu_custom_call.1} parent=5 // pred_check_branch
        %486 = sbr.rel (%p483) target = $region80
      $region79: #{tpu_custom_call.1} parent=5 // pred_region
        %s487 = ssub.s32 %s27, 1
        // Predicated region
        $region81: #{tpu_custom_call.1} parent=79 // pred_check
          %p488 = pneg %p158
        $region82: #{tpu_custom_call.1} parent=79 // pred_check_branch
          %490 = sbr.rel (%p488) target = $region84
        $region83: #{tpu_custom_call.1} parent=79 // pred_region
          %491 = dma.done [#allocation3], 16
        $region84: #{tpu_custom_call.1} parent=79 // pred_fallthru
          _
        // Predicated region
        $region85: #{tpu_custom_call.1} parent=79 // pred_check
          %p492 = pneg %p179
        $region86: #{tpu_custom_call.1} parent=79 // pred_check_branch
          %494 = sbr.rel (%p492) target = $region88
        $region87: #{tpu_custom_call.1} parent=79 // pred_region
          %495 = dma.done [#allocation6], 16
        $region88: #{tpu_custom_call.1} parent=79 // pred_fallthru
          _
        // Predicated region
        $region89: #{tpu_custom_call.1} parent=79 // pred_check
          %p496 = pneg %p200
        $region90: #{tpu_custom_call.1} parent=79 // pred_check_branch
          %498 = sbr.rel (%p496) target = $region92
        $region91: #{tpu_custom_call.1} parent=79 // pred_region
          %499 = dma.done [#allocation6], 16
        $region92: #{tpu_custom_call.1} parent=79 // pred_fallthru
          _
        // Predicated region
        $region93: #{tpu_custom_call.1} parent=79 // pred_check
          %p500 = pneg %p221
        $region94: #{tpu_custom_call.1} parent=79 // pred_check_branch
          %502 = sbr.rel (%p500) target = $region96
        $region95: #{tpu_custom_call.1} parent=79 // pred_region
          %503 = dma.done [#allocation9], 16
        $region96: #{tpu_custom_call.1} parent=79 // pred_fallthru
          _
        // Predicated region
        $region97: #{tpu_custom_call.1} parent=79 // pred_check
          %p504 = pneg %p242
        $region98: #{tpu_custom_call.1} parent=79 // pred_check_branch
          %506 = sbr.rel (%p504) target = $region100
        $region99: #{tpu_custom_call.1} parent=79 // pred_region
          %507 = dma.done [#allocation9], 16
        $region100: #{tpu_custom_call.1} parent=79 // pred_fallthru
          _
        %p508 = scmp.lt.s32.totalorder %s32, 1
        %s509 = scalar_select %p508, %s32, 1
        %s510 = smul.addr %s509, 8
        %s511 = scalar_lea.vmem %s0, %s510
        %p512 = pneg %p53
        %p513 = pneg %p50
        %p514 = pneg %p74
        %p515 = pneg %p71
        %p516 = pneg %p95
        %p517 = pneg %p92
        %p518 = pneg %p116
        %p519 = pneg %p113
        %p520 = pneg %p137
        %p521 = pneg %p134
        %p522 = pneg %p158
        %p523 = pneg %p155
        %p524 = pneg %p179
        %p525 = pneg %p176
        %p526 = pneg %p200
        %p527 = pneg %p197
        %p528 = pneg %p221
        %p529 = pneg %p218
        %p530 = pneg %p242
        %p531 = pneg %p239
        %p532 = pneg %p263
        %p533 = pneg %p260
        %p534 = pneg %p284
        %p535 = pneg %p281
        %p536 = pneg %p305
        %p537 = pneg %p302
        %p538 = pneg %p326
        %p539 = pneg %p323
        %p540 = pneg %p347
        %p541 = pneg %p344
        %p542 = pneg %p373
        %p543 = pneg %p370
        %s544 = sand.u32 %s360, 1
        %s545 = scalar_lea.sflag [#allocation4], %s544
        %s546 = sand.u32 %s360, 1
        %s547 = smul.addr %s546, 8
        %s548 = scalar_lea.vmem [#allocation11], %s547
        %p549 = scmp.lt.s32.totalorder %s32, 1
        %s550 = scalar_select %p549, %s32, 1
        %s551 = smul.addr %s550, 8
        %s552 = scalar_lea.vmem %s0, %s551
        %v554 = vld [vmem:[%s552] sm:$0xff]
        %v555 = vld [vmem:[#allocation2] sm:$0x1]
        %v556 = vld [vmem:[#allocation5] sm:$0x1]
        %vm557 = vcmask 261120
        %v558 = vsel %vm557, %v554, 0.0
        %559 = vadd.xlane.f32.xlu0 %v558
        %v560 = vpop.xlane.xlu0 %559
        %v561 = vrcp.pop 32.0
        %v562 = vmul.f32 %v560, %v561
        %v563 = vsub.f32 %v554, %v562
        %v564 = vmul.f32 %v563, %v563
        %v565 = vsel %vm557, %v564, 0.0
        %566 = vadd.xlane.f32.xlu0 %v565
        %v567 = vpop.xlane.xlu0 %566
        %v568 = vmul.f32 %v567, %v561
        %v569 = vadd.f32 %v568, 1e-05
        %v570 = vrsqrt.pop %v569
        %v571 = vmul.f32 %v563, %v570
        %v573 = vlaneseq
        %v574 = vshrl.u32 %v573, 7
        %v575 = vsub.s32 0, %v574
        %v576 = vrot.slane %v555, %v575
        %v578 = vmul.f32 %v571, %v576
        %v580 = vlaneseq
        %v581 = vshrl.u32 %v580, 7
        %v582 = vsub.s32 0, %v581
        %v583 = vrot.slane %v556, %v582
        %v585 = vadd.f32 %v578, %v583
        %v586 = vpack.c.bf16 %v585, %v585
        %v587 = vld [vmem:[%s1] sm:$0xf]
        %v588 = vld [vmem:[%s1 + $0x4] sm:$0xf]
        %v589 = vld [vmem:[%s1 + $0x8] sm:$0xf]
        %v590 = vld [vmem:[%s1 + $0xc] sm:$0xf]
        %v591 = vld [vmem:[%s2] sm:$0x1]
        %v593 = vlaneseq
        %v594 = vshrl.u32 %v593, 7
        %v595 = vsub.s32 0, %v594
        %v596 = vrot.slane %v591, %v595
        %v602 = vunpack.c.l.b16 %v587
        %v603 = vunpack.c.l.b16 %v588
        %v604 = vunpack.c.l.b16 %v589
        %v605 = vunpack.c.l.b16 %v590
        %v606 = vpack.c.b16 %v603, %v602
        %v607 = vpack.c.b16 %v605, %v604
        %v611 = vsel %vm557, %v586, 0
        %613 = vmatprep.subr.bf16.mxu0 0
        %614 = vmatpush1.bf16.msra.mxu0 %v606
        %615 = vmatprep.subr.bf16.mxu0 0
        %616 = vmatpush1.bf16.msra.mxu0 %v607
        %617 = vmatprep.subr.bf16.mxu0 0
        %618 = vmatpush1.bf16.msra.mxu0 0
        %619 = vmatprep.subr.bf16.mxu0 0
        %620 = vmatpush1.bf16.msra.mxu0 0
        %621 = vmatprep.subr.bf16.mxu0 0
        %622 = vmatpush1.bf16.msra.mxu0 0
        %623 = vmatprep.subr.bf16.mxu0 0
        %624 = vmatpush1.bf16.msra.mxu0 0
        %625 = vmatprep.subr.bf16.mxu0 0
        %626 = vmatpush1.bf16.msra.mxu0 0
        %627 = vmatprep.subr.bf16.mxu0 0
        %628 = vmatpush1.bf16.msra.mxu0 0
        %629 = vmatprep.subr.bf16.mxu0 0
        %630 = vmatpush1.bf16.msra.mxu0 0
        %631 = vmatprep.subr.bf16.mxu0 0
        %632 = vmatpush1.bf16.msra.mxu0 0
        %633 = vmatprep.subr.bf16.mxu0 0
        %634 = vmatpush1.bf16.msra.mxu0 0
        %635 = vmatprep.subr.bf16.mxu0 0
        %636 = vmatpush1.bf16.msra.mxu0 0
        %637 = vmatprep.subr.bf16.mxu0 0
        %638 = vmatpush1.bf16.msra.mxu0 0
        %639 = vmatprep.subr.bf16.mxu0 0
        %640 = vmatpush1.bf16.msra.mxu0 0
        %641 = vmatprep.subr.bf16.mxu0 0
        %642 = vmatpush1.bf16.msra.mxu0 0
        %643 = vmatprep.subr.bf16.mxu0 0
        %644 = vmatpush1.bf16.msra.mxu0 0
        %645 = vmatprep.mubr.bf16.mxu0 0
        %646 = vmatmul.mubr.bf16.gmra.mrb[0].mxu0 %v611
        %v647 = vpop.f32.mrb[0].mxu0
        %v648 = vadd.f32 %v596, %v647
        %v649 = vpop.f32.mrb[0].mxu0
        %v650 = vpop.f32.mrb[0].mxu0
        %v651 = vpop.f32.mrb[0].mxu0
        %652 = vdwg.mxu0
        %v653 = vpack.c.bf16 %v648, %v648
        %v654 = vlaneseq
        %v655 = vshrl.u32 %v654, 7
        %v656 = vlaneseq
        %v657 = vand.u32 %v656, 127
        %vm658 = vcmp.gt.s32.totalorder %v657, %v655
        %v659 = vsel %vm658, -1e+30, 0.0
        %661 = vrot.lane.b32.xlu0 %v653, 96
        %v662 = vpop.permute.xlu0 %661
        %vm663 = vcmask 64512
        %v665 = vsel %vm663, %v653, 0
        %v668 = vsel %vm663, %v662, 0
        %670 = vmatprep.subr.bf16.mxu0 0
        %671 = vmatpush1.bf16.xpose.msra.mxu0 %v668
        %672 = vmatprep.subr.bf16.mxu0 0
        %673 = vmatpush1.bf16.xpose.msra.mxu0 0
        %674 = vmatprep.subr.bf16.mxu0 0
        %675 = vmatpush1.bf16.xpose.msra.mxu0 0
        %676 = vmatprep.subr.bf16.mxu0 0
        %677 = vmatpush1.bf16.xpose.msra.mxu0 0
        %678 = vmatprep.subr.bf16.mxu0 0
        %679 = vmatpush1.bf16.xpose.msra.mxu0 0
        %680 = vmatprep.subr.bf16.mxu0 0
        %681 = vmatpush1.bf16.xpose.msra.mxu0 0
        %682 = vmatprep.subr.bf16.mxu0 0
        %683 = vmatpush1.bf16.xpose.msra.mxu0 0
        %684 = vmatprep.subr.bf16.mxu0 0
        %685 = vmatpush1.bf16.xpose.msra.mxu0 0
        %686 = vmatprep.subr.bf16.mxu0 0
        %687 = vmatpush1.bf16.xpose.msra.mxu0 0
        %688 = vmatprep.subr.bf16.mxu0 0
        %689 = vmatpush1.bf16.xpose.msra.mxu0 0
        %690 = vmatprep.subr.bf16.mxu0 0
        %691 = vmatpush1.bf16.xpose.msra.mxu0 0
        %692 = vmatprep.subr.bf16.mxu0 0
        %693 = vmatpush1.bf16.xpose.msra.mxu0 0
        %694 = vmatprep.subr.bf16.mxu0 0
        %695 = vmatpush1.bf16.xpose.msra.mxu0 0
        %696 = vmatprep.subr.bf16.mxu0 0
        %697 = vmatpush1.bf16.xpose.msra.mxu0 0
        %698 = vmatprep.subr.bf16.mxu0 0
        %699 = vmatpush1.bf16.xpose.msra.mxu0 0
        %700 = vmatprep.subr.bf16.mxu0 0
        %701 = vmatpush1.bf16.xpose.msra.mxu0 0
        %702 = vmatprep.mubr.bf16.mxu0 0
        %703 = vmatmul.mubr.bf16.gmra.mrb[0].mxu0 %v665
        %v704 = vpop.f32.mrb[0].mxu0
        %v705 = vadd.f32 %v659, %v704
        %v706 = vpop.f32.mrb[0].mxu0
        %v707 = vpop.f32.mrb[0].mxu0
        %v708 = vpop.f32.mrb[0].mxu0
        %709 = vdwg.mxu0
        %v710 = vsel %vm663, %v705, -inf
        %711 = vmax.xlane.f32.xlu0 %v710
        %v712 = vpop.xlane.xlu0 %711
        %v713 = vsub.f32 %v705, %v712
        %v714 = vmul.f32 %v713, 1.442695
        %v715 = vpow.pop %v714
        %v716 = vsel %vm663, %v715, 0.0
        %717 = vadd.xlane.f32.xlu0 %v716
        %v718 = vpop.xlane.xlu0 %717
        %v719 = vrcp.pop %v718
        %v720 = vmul.f32 %v715, %v719
        %v721 = vpack.c.bf16 %v720, %v720
        %722 = vrot.lane.b32.xlu0 %v653, 64
        %v723 = vpop.permute.xlu0 %722
        %v725 = vsel %vm663, %v721, 0
        %vm727 = vcmask 1043456
        %v729 = vsel %vm727, %v723, 0
        %731 = vmatprep.subr.bf16.mxu0 0
        %732 = vmatpush1.bf16.msra.mxu0 %v729
        %733 = vmatprep.subr.bf16.mxu0 0
        %734 = vmatpush1.bf16.msra.mxu0 0
        %735 = vmatprep.subr.bf16.mxu0 0
        %736 = vmatpush1.bf16.msra.mxu0 0
        %737 = vmatprep.subr.bf16.mxu0 0
        %738 = vmatpush1.bf16.msra.mxu0 0
        %739 = vmatprep.subr.bf16.mxu0 0
        %740 = vmatpush1.bf16.msra.mxu0 0
        %741 = vmatprep.subr.bf16.mxu0 0
        %742 = vmatpush1.bf16.msra.mxu0 0
        %743 = vmatprep.subr.bf16.mxu0 0
        %744 = vmatpush1.bf16.msra.mxu0 0
        %745 = vmatprep.subr.bf16.mxu0 0
        %746 = vmatpush1.bf16.msra.mxu0 0
        %747 = vmatprep.subr.bf16.mxu0 0
        %748 = vmatpush1.bf16.msra.mxu0 0
        %749 = vmatprep.subr.bf16.mxu0 0
        %750 = vmatpush1.bf16.msra.mxu0 0
        %751 = vmatprep.subr.bf16.mxu0 0
        %752 = vmatpush1.bf16.msra.mxu0 0
        %753 = vmatprep.subr.bf16.mxu0 0
        %754 = vmatpush1.bf16.msra.mxu0 0
        %755 = vmatprep.subr.bf16.mxu0 0
        %756 = vmatpush1.bf16.msra.mxu0 0
        %757 = vmatprep.subr.bf16.mxu0 0
        %758 = vmatpush1.bf16.msra.mxu0 0
        %759 = vmatprep.subr.bf16.mxu0 0
        %760 = vmatpush1.bf16.msra.mxu0 0
        %761 = vmatprep.subr.bf16.mxu0 0
        %762 = vmatpush1.bf16.msra.mxu0 0
        %763 = vmatprep.mubr.bf16.mxu0 0
        %764 = vmatmul.mubr.bf16.gmra.mrb[0].mxu0 %v725
        %v765 = vpop.f32.mrb[0].mxu0
        %v766 = vadd.f32 0.0, %v765
        %v767 = vpop.f32.mrb[0].mxu0
        %v768 = vpop.f32.mrb[0].mxu0
        %v769 = vpop.f32.mrb[0].mxu0
        %770 = vdwg.mxu0
        %771 = vrot.lane.b32.xlu0 %v653, 120
        %v772 = vpop.permute.xlu0 %771
        %773 = vrot.lane.b32.xlu0 %v653, 88
        %v774 = vpop.permute.xlu0 %773
        %v776 = vsel %vm663, %v772, 0
        %v779 = vsel %vm663, %v774, 0
        %781 = vmatprep.subr.bf16.mxu0 0
        %782 = vmatpush1.bf16.xpose.msra.mxu0 %v779
        %783 = vmatprep.subr.bf16.mxu0 0
        %784 = vmatpush1.bf16.xpose.msra.mxu0 0
        %785 = vmatprep.subr.bf16.mxu0 0
        %786 = vmatpush1.bf16.xpose.msra.mxu0 0
        %787 = vmatprep.subr.bf16.mxu0 0
        %788 = vmatpush1.bf16.xpose.msra.mxu0 0
        %789 = vmatprep.subr.bf16.mxu0 0
        %790 = vmatpush1.bf16.xpose.msra.mxu0 0
        %791 = vmatprep.subr.bf16.mxu0 0
        %792 = vmatpush1.bf16.xpose.msra.mxu0 0
        %793 = vmatprep.subr.bf16.mxu0 0
        %794 = vmatpush1.bf16.xpose.msra.mxu0 0
        %795 = vmatprep.subr.bf16.mxu0 0
        %796 = vmatpush1.bf16.xpose.msra.mxu0 0
        %797 = vmatprep.subr.bf16.mxu0 0
        %798 = vmatpush1.bf16.xpose.msra.mxu0 0
        %799 = vmatprep.subr.bf16.mxu0 0
        %800 = vmatpush1.bf16.xpose.msra.mxu0 0
        %801 = vmatprep.subr.bf16.mxu0 0
        %802 = vmatpush1.bf16.xpose.msra.mxu0 0
        %803 = vmatprep.subr.bf16.mxu0 0
        %804 = vmatpush1.bf16.xpose.msra.mxu0 0
        %805 = vmatprep.subr.bf16.mxu0 0
        %806 = vmatpush1.bf16.xpose.msra.mxu0 0
        %807 = vmatprep.subr.bf16.mxu0 0
        %808 = vmatpush1.bf16.xpose.msra.mxu0 0
        %809 = vmatprep.subr.bf16.mxu0 0
        %810 = vmatpush1.bf16.xpose.msra.mxu0 0
        %811 = vmatprep.subr.bf16.mxu0 0
        %812 = vmatpush1.bf16.xpose.msra.mxu0 0
        %813 = vmatprep.mubr.bf16.mxu0 0
        %814 = vmatmul.mubr.bf16.gmra.mrb[0].mxu0 %v776
        %v815 = vpop.f32.mrb[0].mxu0
        %v816 = vadd.f32 %v659, %v815
        %v817 = vpop.f32.mrb[0].mxu0
        %v818 = vpop.f32.mrb[0].mxu0
        %v819 = vpop.f32.mrb[0].mxu0
        %820 = vdwg.mxu0
        %v821 = vsel %vm663, %v816, -inf
        %822 = vmax.xlane.f32.xlu0 %v821
        %v823 = vpop.xlane.xlu0 %822
        %v824 = vsub.f32 %v816, %v823
        %v825 = vmul.f32 %v824, 1.442695
        %v826 = vpow.pop %v825
        %v827 = vsel %vm663, %v826, 0.0
        %828 = vadd.xlane.f32.xlu0 %v827
        %v829 = vpop.xlane.xlu0 %828
        %v830 = vrcp.pop %v829
        %v831 = vmul.f32 %v826, %v830
        %v832 = vpack.c.bf16 %v831, %v831
        %833 = vrot.lane.b32.xlu0 %v653, 56
        %v834 = vpop.permute.xlu0 %833
        %v836 = vsel %vm663, %v832, 0
        %v839 = vsel %vm727, %v834, 0
        %841 = vmatprep.subr.bf16.mxu0 0
        %842 = vmatpush1.bf16.msra.mxu0 %v839
        %843 = vmatprep.subr.bf16.mxu0 0
        %844 = vmatpush1.bf16.msra.mxu0 0
        %845 = vmatprep.subr.bf16.mxu0 0
        %846 = vmatpush1.bf16.msra.mxu0 0
        %847 = vmatprep.subr.bf16.mxu0 0
        %848 = vmatpush1.bf16.msra.mxu0 0
        %849 = vmatprep.subr.bf16.mxu0 0
        %850 = vmatpush1.bf16.msra.mxu0 0
        %851 = vmatprep.subr.bf16.mxu0 0
        %852 = vmatpush1.bf16.msra.mxu0 0
        %853 = vmatprep.subr.bf16.mxu0 0
        %854 = vmatpush1.bf16.msra.mxu0 0
        %855 = vmatprep.subr.bf16.mxu0 0
        %856 = vmatpush1.bf16.msra.mxu0 0
        %857 = vmatprep.subr.bf16.mxu0 0
        %858 = vmatpush1.bf16.msra.mxu0 0
        %859 = vmatprep.subr.bf16.mxu0 0
        %860 = vmatpush1.bf16.msra.mxu0 0
        %861 = vmatprep.subr.bf16.mxu0 0
        %862 = vmatpush1.bf16.msra.mxu0 0
        %863 = vmatprep.subr.bf16.mxu0 0
        %864 = vmatpush1.bf16.msra.mxu0 0
        %865 = vmatprep.subr.bf16.mxu0 0
        %866 = vmatpush1.bf16.msra.mxu0 0
        %867 = vmatprep.subr.bf16.mxu0 0
        %868 = vmatpush1.bf16.msra.mxu0 0
        %869 = vmatprep.subr.bf16.mxu0 0
        %870 = vmatpush1.bf16.msra.mxu0 0
        %871 = vmatprep.subr.bf16.mxu0 0
        %872 = vmatpush1.bf16.msra.mxu0 0
        %873 = vmatprep.mubr.bf16.mxu0 0
        %874 = vmatmul.mubr.bf16.gmra.mrb[0].mxu0 %v836
        %v875 = vpop.f32.mrb[0].mxu0
        %v876 = vadd.f32 0.0, %v875
        %v877 = vpop.f32.mrb[0].mxu0
        %v878 = vpop.f32.mrb[0].mxu0
        %v879 = vpop.f32.mrb[0].mxu0
        %880 = vdwg.mxu0
        %881 = vrot.lane.b32.xlu0 %v653, 112
        %v882 = vpop.permute.xlu0 %881
        %883 = vrot.lane.b32.xlu0 %v653, 80
        %v884 = vpop.permute.xlu0 %883
        %v886 = vsel %vm663, %v882, 0
        %v889 = vsel %vm663, %v884, 0
        %891 = vmatprep.subr.bf16.mxu0 0
        %892 = vmatpush1.bf16.xpose.msra.mxu0 %v889
        %893 = vmatprep.subr.bf16.mxu0 0
        %894 = vmatpush1.bf16.xpose.msra.mxu0 0
        %895 = vmatprep.subr.bf16.mxu0 0
        %896 = vmatpush1.bf16.xpose.msra.mxu0 0
        %897 = vmatprep.subr.bf16.mxu0 0
        %898 = vmatpush1.bf16.xpose.msra.mxu0 0
        %899 = vmatprep.subr.bf16.mxu0 0
        %900 = vmatpush1.bf16.xpose.msra.mxu0 0
        %901 = vmatprep.subr.bf16.mxu0 0
        %902 = vmatpush1.bf16.xpose.msra.mxu0 0
        %903 = vmatprep.subr.bf16.mxu0 0
        %904 = vmatpush1.bf16.xpose.msra.mxu0 0
        %905 = vmatprep.subr.bf16.mxu0 0
        %906 = vmatpush1.bf16.xpose.msra.mxu0 0
        %907 = vmatprep.subr.bf16.mxu0 0
        %908 = vmatpush1.bf16.xpose.msra.mxu0 0
        %909 = vmatprep.subr.bf16.mxu0 0
        %910 = vmatpush1.bf16.xpose.msra.mxu0 0
        %911 = vmatprep.subr.bf16.mxu0 0
        %912 = vmatpush1.bf16.xpose.msra.mxu0 0
        %913 = vmatprep.subr.bf16.mxu0 0
        %914 = vmatpush1.bf16.xpose.msra.mxu0 0
        %915 = vmatprep.subr.bf16.mxu0 0
        %916 = vmatpush1.bf16.xpose.msra.mxu0 0
        %917 = vmatprep.subr.bf16.mxu0 0
        %918 = vmatpush1.bf16.xpose.msra.mxu0 0
        %919 = vmatprep.subr.bf16.mxu0 0
        %920 = vmatpush1.bf16.xpose.msra.mxu0 0
        %921 = vmatprep.subr.bf16.mxu0 0
        %922 = vmatpush1.bf16.xpose.msra.mxu0 0
        %923 = vmatprep.mubr.bf16.mxu0 0
        %924 = vmatmul.mubr.bf16.gmra.mrb[0].mxu0 %v886
        %v925 = vpop.f32.mrb[0].mxu0
        %v926 = vadd.f32 %v659, %v925
        %v927 = vpop.f32.mrb[0].mxu0
        %v928 = vpop.f32.mrb[0].mxu0
        %v929 = vpop.f32.mrb[0].mxu0
        %930 = vdwg.mxu0
        %v931 = vsel %vm663, %v926, -inf
        %932 = vmax.xlane.f32.xlu0 %v931
        %v933 = vpop.xlane.xlu0 %932
        %v934 = vsub.f32 %v926, %v933
        %v935 = vmul.f32 %v934, 1.442695
        %v936 = vpow.pop %v935
        %v937 = vsel %vm663, %v936, 0.0
        %938 = vadd.xlane.f32.xlu0 %v937
        %v939 = vpop.xlane.xlu0 %938
        %v940 = vrcp.pop %v939
        %v941 = vmul.f32 %v936, %v940
        %v942 = vpack.c.bf16 %v941, %v941
        %943 = vrot.lane.b32.xlu0 %v653, 48
        %v944 = vpop.permute.xlu0 %943
        %v946 = vsel %vm663, %v942, 0
        %v949 = vsel %vm727, %v944, 0
        %951 = vmatprep.subr.bf16.mxu0 0
        %952 = vmatpush1.bf16.msra.mxu0 %v949
        %953 = vmatprep.subr.bf16.mxu0 0
        %954 = vmatpush1.bf16.msra.mxu0 0
        %955 = vmatprep.subr.bf16.mxu0 0
        %956 = vmatpush1.bf16.msra.mxu0 0
        %957 = vmatprep.subr.bf16.mxu0 0
        %958 = vmatpush1.bf16.msra.mxu0 0
        %959 = vmatprep.subr.bf16.mxu0 0
        %960 = vmatpush1.bf16.msra.mxu0 0
        %961 = vmatprep.subr.bf16.mxu0 0
        %962 = vmatpush1.bf16.msra.mxu0 0
        %963 = vmatprep.subr.bf16.mxu0 0
        %964 = vmatpush1.bf16.msra.mxu0 0
        %965 = vmatprep.subr.bf16.mxu0 0
        %966 = vmatpush1.bf16.msra.mxu0 0
        %967 = vmatprep.subr.bf16.mxu0 0
        %968 = vmatpush1.bf16.msra.mxu0 0
        %969 = vmatprep.subr.bf16.mxu0 0
        %970 = vmatpush1.bf16.msra.mxu0 0
        %971 = vmatprep.subr.bf16.mxu0 0
        %972 = vmatpush1.bf16.msra.mxu0 0
        %973 = vmatprep.subr.bf16.mxu0 0
        %974 = vmatpush1.bf16.msra.mxu0 0
        %975 = vmatprep.subr.bf16.mxu0 0
        %976 = vmatpush1.bf16.msra.mxu0 0
        %977 = vmatprep.subr.bf16.mxu0 0
        %978 = vmatpush1.bf16.msra.mxu0 0
        %979 = vmatprep.subr.bf16.mxu0 0
        %980 = vmatpush1.bf16.msra.mxu0 0
        %981 = vmatprep.subr.bf16.mxu0 0
        %982 = vmatpush1.bf16.msra.mxu0 0
        %983 = vmatprep.mubr.bf16.mxu0 0
        %984 = vmatmul.mubr.bf16.gmra.mrb[0].mxu0 %v946
        %v985 = vpop.f32.mrb[0].mxu0
        %v986 = vadd.f32 0.0, %v985
        %v987 = vpop.f32.mrb[0].mxu0
        %v988 = vpop.f32.mrb[0].mxu0
        %v989 = vpop.f32.mrb[0].mxu0
        %990 = vdwg.mxu0
        %991 = vrot.lane.b32.xlu0 %v653, 104
        %v992 = vpop.permute.xlu0 %991
        %993 = vrot.lane.b32.xlu0 %v653, 72
        %v994 = vpop.permute.xlu0 %993
        %v996 = vsel %vm663, %v992, 0
        %v999 = vsel %vm663, %v994, 0
        %1001 = vmatprep.subr.bf16.mxu0 0
        %1002 = vmatpush1.bf16.xpose.msra.mxu0 %v999
        %1003 = vmatprep.subr.bf16.mxu0 0
        %1004 = vmatpush1.bf16.xpose.msra.mxu0 0
        %1005 = vmatprep.subr.bf16.mxu0 0
        %1006 = vmatpush1.bf16.xpose.msra.mxu0 0
        %1007 = vmatprep.subr.bf16.mxu0 0
        %1008 = vmatpush1.bf16.xpose.msra.mxu0 0
        %1009 = vmatprep.subr.bf16.mxu0 0
        %1010 = vmatpush1.bf16.xpose.msra.mxu0 0
        %1011 = vmatprep.subr.bf16.mxu0 0
        %1012 = vmatpush1.bf16.xpose.msra.mxu0 0
        %1013 = vmatprep.subr.bf16.mxu0 0
        %1014 = vmatpush1.bf16.xpose.msra.mxu0 0
        %1015 = vmatprep.subr.bf16.mxu0 0
        %1016 = vmatpush1.bf16.xpose.msra.mxu0 0
        %1017 = vmatprep.subr.bf16.mxu0 0
        %1018 = vmatpush1.bf16.xpose.msra.mxu0 0
        %1019 = vmatprep.subr.bf16.mxu0 0
        %1020 = vmatpush1.bf16.xpose.msra.mxu0 0
        %1021 = vmatprep.subr.bf16.mxu0 0
        %1022 = vmatpush1.bf16.xpose.msra.mxu0 0
        %1023 = vmatprep.subr.bf16.mxu0 0
        %1024 = vmatpush1.bf16.xpose.msra.mxu0 0
        %1025 = vmatprep.subr.bf16.mxu0 0
        %1026 = vmatpush1.bf16.xpose.msra.mxu0 0
        %1027 = vmatprep.subr.bf16.mxu0 0
        %1028 = vmatpush1.bf16.xpose.msra.mxu0 0
        %1029 = vmatprep.subr.bf16.mxu0 0
        %1030 = vmatpush1.bf16.xpose.msra.mxu0 0
        %1031 = vmatprep.subr.bf16.mxu0 0
        %1032 = vmatpush1.bf16.xpose.msra.mxu0 0
        %1033 = vmatprep.mubr.bf16.mxu0 0
        %1034 = vmatmul.mubr.bf16.gmra.mrb[0].mxu0 %v996
        %v1035 = vpop.f32.mrb[0].mxu0
        %v1036 = vadd.f32 %v659, %v1035
        %v1037 = vpop.f32.mrb[0].mxu0
        %v1038 = vpop.f32.mrb[0].mxu0
        %v1039 = vpop.f32.mrb[0].mxu0
        %1040 = vdwg.mxu0
        %v1041 = vsel %vm663, %v1036, -inf
        %1042 = vmax.xlane.f32.xlu0 %v1041
        %v1043 = vpop.xlane.xlu0 %1042
        %v1044 = vsub.f32 %v1036, %v1043
        %v1045 = vmul.f32 %v1044, 1.442695
        %v1046 = vpow.pop %v1045
        %v1047 = vsel %vm663, %v1046, 0.0
        %1048 = vadd.xlane.f32.xlu0 %v1047
        %v1049 = vpop.xlane.xlu0 %1048
        %v1050 = vrcp.pop %v1049
        %v1051 = vmul.f32 %v1046, %v1050
        %v1052 = vpack.c.bf16 %v1051, %v1051
        %1053 = vrot.lane.b32.xlu0 %v653, 40
        %v1054 = vpop.permute.xlu0 %1053
        %v1056 = vsel %vm663, %v1052, 0
        %v1059 = vsel %vm727, %v1054, 0
        %1061 = vmatprep.subr.bf16.mxu0 0
        %1062 = vmatpush1.bf16.msra.mxu0 %v1059
        %1063 = vmatprep.subr.bf16.mxu0 0
        %1064 = vmatpush1.bf16.msra.mxu0 0
        %1065 = vmatprep.subr.bf16.mxu0 0
        %1066 = vmatpush1.bf16.msra.mxu0 0
        %1067 = vmatprep.subr.bf16.mxu0 0
        %1068 = vmatpush1.bf16.msra.mxu0 0
        %1069 = vmatprep.subr.bf16.mxu0 0
        %1070 = vmatpush1.bf16.msra.mxu0 0
        %1071 = vmatprep.subr.bf16.mxu0 0
        %1072 = vmatpush1.bf16.msra.mxu0 0
        %1073 = vmatprep.subr.bf16.mxu0 0
        %1074 = vmatpush1.bf16.msra.mxu0 0
        %1075 = vmatprep.subr.bf16.mxu0 0
        %1076 = vmatpush1.bf16.msra.mxu0 0
        %1077 = vmatprep.subr.bf16.mxu0 0
        %1078 = vmatpush1.bf16.msra.mxu0 0
        %1079 = vmatprep.subr.bf16.mxu0 0
        %1080 = vmatpush1.bf16.msra.mxu0 0
        %1081 = vmatprep.subr.bf16.mxu0 0
        %1082 = vmatpush1.bf16.msra.mxu0 0
        %1083 = vmatprep.subr.bf16.mxu0 0
        %1084 = vmatpush1.bf16.msra.mxu0 0
        %1085 = vmatprep.subr.bf16.mxu0 0
        %1086 = vmatpush1.bf16.msra.mxu0 0
        %1087 = vmatprep.subr.bf16.mxu0 0
        %1088 = vmatpush1.bf16.msra.mxu0 0
        %1089 = vmatprep.subr.bf16.mxu0 0
        %1090 = vmatpush1.bf16.msra.mxu0 0
        %1091 = vmatprep.subr.bf16.mxu0 0
        %1092 = vmatpush1.bf16.msra.mxu0 0
        %1093 = vmatprep.mubr.bf16.mxu0 0
        %1094 = vmatmul.mubr.bf16.gmra.mrb[0].mxu0 %v1056
        %v1095 = vpop.f32.mrb[0].mxu0
        %v1096 = vadd.f32 0.0, %v1095
        %v1097 = vpop.f32.mrb[0].mxu0
        %v1098 = vpop.f32.mrb[0].mxu0
        %v1099 = vpop.f32.mrb[0].mxu0
        %1100 = vdwg.mxu0
        %1102 = vrot.lane.b32.xlu0 %v876, 8
        %v1103 = vpop.permute.xlu0 %1102
        %1106 = vrot.lane.b32.xlu0 %v986, 16
        %v1107 = vpop.permute.xlu0 %1106
        %1110 = vrot.lane.b32.xlu0 %v1096, 24
        %v1111 = vpop.permute.xlu0 %1110
        %v1113 = vsel %vm663, %v766, %v1103
        %vm1114 = vcmask 130048
        %v1115 = vsel %vm1114, %v1113, %v1107
        %vm1116 = vcmask 195584
        %v1117 = vsel %vm1116, %v1115, %v1111
        %v1118 = vpack.c.bf16 %v1117, %v1117
        %v1119 = vld [vmem:[%s3] sm:$0xf]
        %v1120 = vld [vmem:[%s3 + $0x4] sm:$0xf]
        %v1121 = vld [vmem:[%s3 + $0x8] sm:$0xf]
        %v1122 = vld [vmem:[%s3 + $0xc] sm:$0xf]
        %v1123 = vld [vmem:[%s4] sm:$0x1]
        %v1125 = vlaneseq
        %v1126 = vshrl.u32 %v1125, 7
        %v1127 = vsub.s32 0, %v1126
        %v1128 = vrot.slane %v1123, %v1127
        %v1134 = vunpack.c.l.b16 %v1119
        %v1135 = vunpack.c.l.b16 %v1120
        %v1136 = vunpack.c.l.b16 %v1121
        %v1137 = vunpack.c.l.b16 %v1122
        %v1138 = vpack.c.b16 %v1135, %v1134
        %v1139 = vpack.c.b16 %v1137, %v1136
        %v1143 = vsel %vm557, %v1118, 0
        %1145 = vmatprep.subr.bf16.mxu0 0
        %1146 = vmatpush1.bf16.msra.mxu0 %v1138
        %1147 = vmatprep.subr.bf16.mxu0 0
        %1148 = vmatpush1.bf16.msra.mxu0 %v1139
        %1149 = vmatprep.subr.bf16.mxu0 0
        %1150 = vmatpush1.bf16.msra.mxu0 0
        %1151 = vmatprep.subr.bf16.mxu0 0
        %1152 = vmatpush1.bf16.msra.mxu0 0
        %1153 = vmatprep.subr.bf16.mxu0 0
        %1154 = vmatpush1.bf16.msra.mxu0 0
        %1155 = vmatprep.subr.bf16.mxu0 0
        %1156 = vmatpush1.bf16.msra.mxu0 0
        %1157 = vmatprep.subr.bf16.mxu0 0
        %1158 = vmatpush1.bf16.msra.mxu0 0
        %1159 = vmatprep.subr.bf16.mxu0 0
        %1160 = vmatpush1.bf16.msra.mxu0 0
        %1161 = vmatprep.subr.bf16.mxu0 0
        %1162 = vmatpush1.bf16.msra.mxu0 0
        %1163 = vmatprep.subr.bf16.mxu0 0
        %1164 = vmatpush1.bf16.msra.mxu0 0
        %1165 = vmatprep.subr.bf16.mxu0 0
        %1166 = vmatpush1.bf16.msra.mxu0 0
        %1167 = vmatprep.subr.bf16.mxu0 0
        %1168 = vmatpush1.bf16.msra.mxu0 0
        %1169 = vmatprep.subr.bf16.mxu0 0
        %1170 = vmatpush1.bf16.msra.mxu0 0
        %1171 = vmatprep.subr.bf16.mxu0 0
        %1172 = vmatpush1.bf16.msra.mxu0 0
        %1173 = vmatprep.subr.bf16.mxu0 0
        %1174 = vmatpush1.bf16.msra.mxu0 0
        %1175 = vmatprep.subr.bf16.mxu0 0
        %1176 = vmatpush1.bf16.msra.mxu0 0
        %1177 = vmatprep.mubr.bf16.mxu0 0
        %1178 = vmatmul.mubr.bf16.gmra.mrb[0].mxu0 %v1143
        %v1179 = vpop.f32.mrb[0].mxu0
        %v1180 = vadd.f32 %v1128, %v1179
        %v1181 = vpop.f32.mrb[0].mxu0
        %v1182 = vpop.f32.mrb[0].mxu0
        %v1183 = vpop.f32.mrb[0].mxu0
        %1184 = vdwg.mxu0
        %v1185 = vadd.f32 %v1180, %v554
        %v1186 = vld [vmem:[#allocation7] sm:$0x1]
        %v1187 = vld [vmem:[#allocation8] sm:$0x1]
        %v1188 = vsel %vm557, %v1185, 0.0
        %1189 = vadd.xlane.f32.xlu0 %v1188
        %v1190 = vpop.xlane.xlu0 %1189
        %v1191 = vmul.f32 %v1190, %v561
        %v1192 = vsub.f32 %v1185, %v1191
        %v1193 = vmul.f32 %v1192, %v1192
        %v1194 = vsel %vm557, %v1193, 0.0
        %1195 = vadd.xlane.f32.xlu0 %v1194
        %v1196 = vpop.xlane.xlu0 %1195
        %v1197 = vmul.f32 %v1196, %v561
        %v1198 = vadd.f32 %v1197, 1e-05
        %v1199 = vrsqrt.pop %v1198
        %v1200 = vmul.f32 %v1192, %v1199
        %v1202 = vlaneseq
        %v1203 = vshrl.u32 %v1202, 7
        %v1204 = vsub.s32 0, %v1203
        %v1205 = vrot.slane %v1186, %v1204
        %v1207 = vmul.f32 %v1200, %v1205
        %v1209 = vlaneseq
        %v1210 = vshrl.u32 %v1209, 7
        %v1211 = vsub.s32 0, %v1210
        %v1212 = vrot.slane %v1187, %v1211
        %v1214 = vadd.f32 %v1207, %v1212
        %v1215 = vld [vmem:[#allocation10] sm:$0x1]
        %v1216 = vld [vmem:[%s10] sm:$0x1]
        %v1217 = vsel %vm557, %v1214, 0.0
        %1218 = vadd.xlane.f32.xlu0 %v1217
        %v1219 = vpop.xlane.xlu0 %1218
        %v1220 = vmul.f32 %v1219, %v561
        %v1221 = vsub.f32 %v1214, %v1220
        %v1222 = vmul.f32 %v1221, %v1221
        %v1223 = vsel %vm557, %v1222, 0.0
        %1224 = vadd.xlane.f32.xlu0 %v1223
        %v1225 = vpop.xlane.xlu0 %1224
        %v1226 = vmul.f32 %v1225, %v561
        %v1227 = vadd.f32 %v1226, 1e-05
        %v1228 = vrsqrt.pop %v1227
        %v1229 = vmul.f32 %v1221, %v1228
        %v1231 = vlaneseq
        %v1232 = vshrl.u32 %v1231, 7
        %v1233 = vsub.s32 0, %v1232
        %v1234 = vrot.slane %v1215, %v1233
        %v1236 = vmul.f32 %v1229, %v1234
        %v1238 = vlaneseq
        %v1239 = vshrl.u32 %v1238, 7
        %v1240 = vsub.s32 0, %v1239
        %v1241 = vrot.slane %v1216, %v1240
        %v1243 = vadd.f32 %v1236, %v1241
        %v1244 = vpack.c.bf16 %v1243, %v1243
        %v1245 = vld [vmem:[%s11] sm:$0xf]
        %v1246 = vld [vmem:[%s11 + $0x4] sm:$0xf]
        %v1247 = vld [vmem:[%s11 + $0x8] sm:$0xf]
        %v1248 = vld [vmem:[%s11 + $0xc] sm:$0xf]
        %v1249 = vld [vmem:[%s12] sm:$0x1]
        %v1251 = vlaneseq
        %v1252 = vshrl.u32 %v1251, 7
        %v1253 = vsub.s32 0, %v1252
        %v1254 = vrot.slane %v1249, %v1253
        %v1260 = vunpack.c.l.b16 %v1245
        %v1261 = vunpack.c.l.b16 %v1246
        %v1262 = vunpack.c.l.b16 %v1247
        %v1263 = vunpack.c.l.b16 %v1248
        %v1264 = vpack.c.b16 %v1261, %v1260
        %v1265 = vpack.c.b16 %v1263, %v1262
        %v1269 = vsel %vm557, %v1244, 0
        %1271 = vmatprep.subr.bf16.mxu0 0
        %1272 = vmatpush1.bf16.msra.mxu0 %v1264
        %1273 = vmatprep.subr.bf16.mxu0 0
        %1274 = vmatpush1.bf16.msra.mxu0 %v1265
        %1275 = vmatprep.subr.bf16.mxu0 0
        %1276 = vmatpush1.bf16.msra.mxu0 0
        %1277 = vmatprep.subr.bf16.mxu0 0
        %1278 = vmatpush1.bf16.msra.mxu0 0
        %1279 = vmatprep.subr.bf16.mxu0 0
        %1280 = vmatpush1.bf16.msra.mxu0 0
        %1281 = vmatprep.subr.bf16.mxu0 0
        %1282 = vmatpush1.bf16.msra.mxu0 0
        %1283 = vmatprep.subr.bf16.mxu0 0
        %1284 = vmatpush1.bf16.msra.mxu0 0
        %1285 = vmatprep.subr.bf16.mxu0 0
        %1286 = vmatpush1.bf16.msra.mxu0 0
        %1287 = vmatprep.subr.bf16.mxu0 0
        %1288 = vmatpush1.bf16.msra.mxu0 0
        %1289 = vmatprep.subr.bf16.mxu0 0
        %1290 = vmatpush1.bf16.msra.mxu0 0
        %1291 = vmatprep.subr.bf16.mxu0 0
        %1292 = vmatpush1.bf16.msra.mxu0 0
        %1293 = vmatprep.subr.bf16.mxu0 0
        %1294 = vmatpush1.bf16.msra.mxu0 0
        %1295 = vmatprep.subr.bf16.mxu0 0
        %1296 = vmatpush1.bf16.msra.mxu0 0
        %1297 = vmatprep.subr.bf16.mxu0 0
        %1298 = vmatpush1.bf16.msra.mxu0 0
        %1299 = vmatprep.subr.bf16.mxu0 0
        %1300 = vmatpush1.bf16.msra.mxu0 0
        %1301 = vmatprep.subr.bf16.mxu0 0
        %1302 = vmatpush1.bf16.msra.mxu0 0
        %1303 = vmatprep.mubr.bf16.mxu0 0
        %1304 = vmatmul.mubr.bf16.gmra.mrb[0].mxu0 %v1269
        %v1305 = vpop.f32.mrb[0].mxu0
        %v1306 = vadd.f32 %v1254, %v1305
        %v1307 = vpop.f32.mrb[0].mxu0
        %v1308 = vpop.f32.mrb[0].mxu0
        %v1309 = vpop.f32.mrb[0].mxu0
        %1310 = vdwg.mxu0
        %v1311 = vmul.f32 %v1306, 0.5
        %v1312 = vmul.f32 %v1306, 0.70710677
        %vm1313 = vcmp.ge.f32.partialorder %v1312, 0.0
        %v1314 = vsel %vm1313, 1.0, -1.0
        %v1315 = vand.u32 2147483647, %v1312
        %v1316 = vmul.f32 %v1315, 0.3275911
        %v1317 = vadd.f32 %v1316, 1.0
        %v1318 = vrcp.pop %v1317
        %v1319 = vmul.f32 1.0, %v1318
        %v1320 = vmul.f32 %v1319, 1.0614054
        %v1321 = vadd.f32 %v1320, -1.4531521
        %v1322 = vmul.f32 %v1321, %v1319
        %v1323 = vadd.f32 %v1322, 1.4214138
        %v1324 = vmul.f32 %v1323, %v1319
        %v1325 = vadd.f32 %v1324, -0.28449672
        %v1326 = vmul.f32 %v1325, %v1319
        %v1327 = vadd.f32 %v1326, 0.2548296
        %v1328 = vmul.f32 %v1327, %v1319
        %v1329 = vsub.f32 0.0, %v1315
        %v1330 = vmul.f32 %v1329, %v1315
        %v1331 = vmul.f32 %v1330, 1.442695
        %v1332 = vpow.pop %v1331
        %v1333 = vmul.f32 %v1328, %v1332
        %v1334 = vsub.f32 1.0, %v1333
        %v1335 = vmul.f32 %v1314, %v1334
        %v1336 = vadd.f32 %v1335, 1.0
        %v1337 = vmul.f32 %v1311, %v1336
        %v1338 = vpack.c.bf16 %v1337, %v1337
        %v1339 = vld [vmem:[%s13] sm:$0xf]
        %v1340 = vld [vmem:[%s13 + $0x4] sm:$0xf]
        %v1341 = vld [vmem:[%s13 + $0x8] sm:$0xf]
        %v1342 = vld [vmem:[%s13 + $0xc] sm:$0xf]
        %v1343 = vld [vmem:[%s13 + $0x10] sm:$0xf]
        %v1344 = vld [vmem:[%s13 + $0x14] sm:$0xf]
        %v1345 = vld [vmem:[%s13 + $0x18] sm:$0xf]
        %v1346 = vld [vmem:[%s13 + $0x1c] sm:$0xf]
        %v1347 = vld [vmem:[%s14] sm:$0x1]
        %v1349 = vlaneseq
        %v1350 = vshrl.u32 %v1349, 7
        %v1351 = vsub.s32 0, %v1350
        %v1352 = vrot.slane %v1347, %v1351
        %v1362 = vunpack.c.l.b16 %v1339
        %v1363 = vunpack.c.l.b16 %v1340
        %v1364 = vunpack.c.l.b16 %v1341
        %v1365 = vunpack.c.l.b16 %v1342
        %v1366 = vunpack.c.l.b16 %v1343
        %v1367 = vunpack.c.l.b16 %v1344
        %v1368 = vunpack.c.l.b16 %v1345
        %v1369 = vunpack.c.l.b16 %v1346
        %v1370 = vpack.c.b16 %v1363, %v1362
        %v1371 = vpack.c.b16 %v1365, %v1364
        %v1372 = vpack.c.b16 %v1367, %v1366
        %v1373 = vpack.c.b16 %v1369, %v1368
        %vm1378 = vcmask 523264
        %v1380 = vsel %vm1378, %v1338, 0
        %1382 = vmatprep.subr.bf16.mxu0 0
        %1383 = vmatpush1.bf16.msra.mxu0 %v1370
        %1384 = vmatprep.subr.bf16.mxu0 0
        %1385 = vmatpush1.bf16.msra.mxu0 %v1371
        %1386 = vmatprep.subr.bf16.mxu0 0
        %1387 = vmatpush1.bf16.msra.mxu0 %v1372
        %1388 = vmatprep.subr.bf16.mxu0 0
        %1389 = vmatpush1.bf16.msra.mxu0 %v1373
        %1390 = vmatprep.subr.bf16.mxu0 0
        %1391 = vmatpush1.bf16.msra.mxu0 0
        %1392 = vmatprep.subr.bf16.mxu0 0
        %1393 = vmatpush1.bf16.msra.mxu0 0
        %1394 = vmatprep.subr.bf16.mxu0 0
        %1395 = vmatpush1.bf16.msra.mxu0 0
        %1396 = vmatprep.subr.bf16.mxu0 0
        %1397 = vmatpush1.bf16.msra.mxu0 0
        %1398 = vmatprep.subr.bf16.mxu0 0
        %1399 = vmatpush1.bf16.msra.mxu0 0
        %1400 = vmatprep.subr.bf16.mxu0 0
        %1401 = vmatpush1.bf16.msra.mxu0 0
        %1402 = vmatprep.subr.bf16.mxu0 0
        %1403 = vmatpush1.bf16.msra.mxu0 0
        %1404 = vmatprep.subr.bf16.mxu0 0
        %1405 = vmatpush1.bf16.msra.mxu0 0
        %1406 = vmatprep.subr.bf16.mxu0 0
        %1407 = vmatpush1.bf16.msra.mxu0 0
        %1408 = vmatprep.subr.bf16.mxu0 0
        %1409 = vmatpush1.bf16.msra.mxu0 0
        %1410 = vmatprep.subr.bf16.mxu0 0
        %1411 = vmatpush1.bf16.msra.mxu0 0
        %1412 = vmatprep.subr.bf16.mxu0 0
        %1413 = vmatpush1.bf16.msra.mxu0 0
        %1414 = vmatprep.mubr.bf16.mxu0 0
        %1415 = vmatmul.mubr.bf16.gmra.mrb[0].mxu0 %v1380
        %v1416 = vpop.f32.mrb[0].mxu0
        %v1417 = vadd.f32 %v1352, %v1416
        %v1418 = vpop.f32.mrb[0].mxu0
        %v1419 = vpop.f32.mrb[0].mxu0
        %v1420 = vpop.f32.mrb[0].mxu0
        %1421 = vdwg.mxu0
        %v1422 = vadd.f32 %v1417, %v1185
        %1423 = vst.msk [vmem:[%s548] sm:$0xff] %vm557, %v1422
        %s1424 = sand.u32 %s360, 1
        %s1425 = scalar_lea.sflag [#allocation4], %s1424
        %s1426 = sand.u32 %s360, 1
        %s1427 = smul.addr %s1426, 8
        %s1428 = scalar_lea.vmem [#allocation11], %s1427
        // Predicated region
        $region101: #{tpu_custom_call.1} parent=79 // pred_check
          %p1429 = pneg %p370
        $region102: #{tpu_custom_call.1} parent=79 // pred_check_branch
          %1431 = sbr.rel (%p1429) target = $region104
        $region103: #{tpu_custom_call.1} parent=79 // pred_region
          %s1433 = ssub.s32 128, 128
          %1434 = vsyncadd %s1425, %s1433
          %s1435 = smul.addr %s32, 128
          %s1436 = scalar_lea.hbm %s15, %s1435
          %s1438 = sshll.u32 %s1428, 4
          %s1439 = int_to_ptr.vmem [resolvable:$true] %s1438
          %1441 = dma.vmem_to_hbm [thread:$0]  %s1439, 128, %s1436, %s1425
        $region104: #{tpu_custom_call.1} parent=79 // pred_fallthru
          _
      $region80: #{tpu_custom_call.1} parent=5 // pred_fallthru
        _
      %p1442 = scmp.le.s32.totalorder 2, %s27
      // Predicated region
      $region105: #{tpu_custom_call.1} parent=5 // pred_check
        %p1443 = pneg %p1442
      $region106: #{tpu_custom_call.1} parent=5 // pred_check_branch
        %1445 = sbr.rel (%p1443) target = $region108
      $region107: #{tpu_custom_call.1} parent=5 // pred_region
        %s1446 = ssub.s32 %s27, 2
        // Predicated region
        $region109: #{tpu_custom_call.1} parent=107 // pred_check
          %p1447 = pneg %p376
        $region110: #{tpu_custom_call.1} parent=107 // pred_check_branch
          %1449 = sbr.rel (%p1447) target = $region112
        $region111: #{tpu_custom_call.1} parent=107 // pred_region
          %s1450 = sand.u32 %s361, 1
          %s1451 = scalar_lea.sflag [#allocation4], %s1450
          %s1452 = sand.u32 %s361, 1
          %s1453 = smul.addr %s1452, 8
          %s1454 = scalar_lea.vmem [#allocation11], %s1453
          %1455 = dma.done %s1451, 128
        $region112: #{tpu_custom_call.1} parent=107 // pred_fallthru
          _
      $region108: #{tpu_custom_call.1} parent=5 // pred_fallthru
        _
    $region6: #{tpu_custom_call.1} parent=1 // loop_footer
      %s31 = sadd.s32 1, %s27
    $region7: #{tpu_custom_call.1} parent=1 // loop_footer_branch
      %26 = sbr.rel target = $region3
    $region8: #{tpu_custom_call.1} parent=1 // loop_exit
      _
    %1456 = vsyncpa [#allocation3], 1
    %s1457 = scalar_lea.sflag [#allocation3], 1
    %1458 = vsyncpa %s1457, 1
    %1459 = vsyncpa [#allocation6], 1
    %1460 = vsyncpa [#allocation9], 1
    %1461 = vsyncpa [#allocation4], 1
    %s1462 = scalar_lea.sflag [#allocation4], 1
    %1463 = vsyncpa %s1462, 1

</llo_original>
